<compile_context>
chip_gen: v7x
topology: tpu7x:2x2x1
jax: 0.10.0
libtpu: 0.0.40
codegen_flags: <defaults>
</compile_context>

<pallas_src>
import jax
import jax.numpy as jnp
from jax.experimental import pallas as pl
from jax.experimental.pallas import tpu as pltpu  # noqa: F401  (gridless kernels; kept for completeness)


# ----------------------------------------------------------------------------
# Model configuration (small, deterministic)
# ----------------------------------------------------------------------------
B = 2                                    # batch
C, H, W = 3, 16, 16
PATCH = 4
P = (H // PATCH) * (W // PATCH)          # 16 patches
PATCH_DIM = C * PATCH * PATCH            # 48
VIS_FEAT = 64                            # vision feature dim
TEXT_DIM = 32                            # CLIP-style text feature dim
EMB_DIM = 64                             # fused observation encoding dim
VOCAB = 100
SEQ = 8                                  # token sequence length
T_HORIZON = 8                            # action horizon
ACT_DIM = 4                              # action dim
TIME_EMB = 32
NOISE_HID = 128

LANE = 128                               # lane-dense padded feature width


# ----------------------------------------------------------------------------
# In-kernel stage helpers (shared by fused pipeline and per-branch kernels so
# both paths compute bit-identical results).
# Convention: matmul operands bf16, accumulation & elementwise math f32.
# ----------------------------------------------------------------------------
def _text_stage(onehot, tok_w, text_w, text_b):
    # onehot: (B*SEQ, LANE) bf16
    emb = jnp.dot(onehot, tok_w, preferred_element_type=jnp.float32)        # (B*SEQ, 128)
    pooled = jnp.mean(emb.reshape(B, SEQ, LANE), axis=1)                    # (B, 128) sublane reduce
    return jnp.dot(pooled.astype(jnp.bfloat16), text_w,
                   preferred_element_type=jnp.float32) + text_b             # (B, 128) f32


def _vision_stage(patches, ft_bf16, patch_w, patch_b, fuse_w, fuse_b):
    feats = jnp.maximum(
        jnp.dot(patches, patch_w, preferred_element_type=jnp.float32) + patch_b, 0.0)
    pooled = jnp.mean(feats.reshape(B, P, LANE), axis=1)                    # (B, 128)
    fused_in = jnp.concatenate([pooled.astype(jnp.bfloat16), ft_bf16], axis=-1)  # (B, 256)
    return jnp.dot(fused_in, fuse_w, preferred_element_type=jnp.float32) + fuse_b


def _noise_stage(temb_bf16, g_bf16, x_bf16, cond_w, cond_b, w1, b1, w2, b2):
    cond_in = jnp.concatenate([temb_bf16, g_bf16], axis=-1)                 # (B, 256)
    cond_h = jnp.maximum(
        jnp.dot(cond_in, cond_w, preferred_element_type=jnp.float32) + cond_b, 0.0)
    h_in = jnp.concatenate([x_bf16, cond_h.astype(jnp.bfloat16)], axis=-1)  # (B, 256)
    h = jnp.maximum(jnp.dot(h_in, w1, preferred_element_type=jnp.float32) + b1, 0.0)
    return jnp.dot(h.astype(jnp.bfloat16), w2, preferred_element_type=jnp.float32) + b2


def _dist_stage(x_bf16, w1, b1, w2, b2, w3, b3):
    h = jnp.maximum(jnp.dot(x_bf16, w1, preferred_element_type=jnp.float32) + b1, 0.0)
    h = jnp.maximum(jnp.dot(h.astype(jnp.bfloat16), w2,
                            preferred_element_type=jnp.float32) + b2, 0.0)
    return jnp.dot(h.astype(jnp.bfloat16), w3, preferred_element_type=jnp.float32) + b3


# ----------------------------------------------------------------------------
# Pallas kernels
# ----------------------------------------------------------------------------
def _text_kernel(onehot_ref, tok_ref, tw_ref, tb_ref, o_ref):
    o_ref[...] = _text_stage(onehot_ref[...], tok_ref[...], tw_ref[...], tb_ref[...])


def _vision_kernel(patch_ref, ft_ref, pw_ref, pb_ref, fw_ref, fb_ref, o_ref):
    o_ref[...] = _vision_stage(patch_ref[...], ft_ref[...], pw_ref[...], pb_ref[...],
                               fw_ref[...], fb_ref[...])


def _noise_kernel(temb_ref, g_ref, x_ref, cw_ref, cb_ref,
                  w1_ref, b1_ref, w2_ref, b2_ref, o_ref):
    o_ref[...] = _noise_stage(temb_ref[...], g_ref[...], x_ref[...],
                              cw_ref[...], cb_ref[...],
                              w1_ref[...], b1_ref[...], w2_ref[...], b2_ref[...])


def _dist_kernel(x_ref, w1_ref, b1_ref, w2_ref, b2_ref, w3_ref, b3_ref, o_ref):
    o_ref[...] = _dist_stage(x_ref[...], w1_ref[...], b1_ref[...],
                             w2_ref[...], b2_ref[...], w3_ref[...], b3_ref[...])


def _pipeline_kernel(onehot_ref, patch_ref, temb_ref, x_ref,
                     tok_ref, tw_ref, tb_ref,
                     pw_ref, pb_ref, fw_ref, fb_ref,
                     cw_ref, cb_ref, w1_ref, b1_ref, w2_ref, b2_ref,
                     dw1_ref, db1_ref, dw2_ref, db2_ref, dw3_ref, db3_ref,
                     ft_out, enc_out, noise_out, dist_out):
    # full dependent chain in one kernel; feat_text / obs_enc stay in vregs
    ft = _text_stage(onehot_ref[...], tok_ref[...], tw_ref[...], tb_ref[...])
    enc = _vision_stage(patch_ref[...], ft.astype(jnp.bfloat16),
                        pw_ref[...], pb_ref[...], fw_ref[...], fb_ref[...])
    enc_bf = enc.astype(jnp.bfloat16)
    noise = _noise_stage(temb_ref[...], enc_bf, x_ref[...],
                         cw_ref[...], cb_ref[...],
                         w1_ref[...], b1_ref[...], w2_ref[...], b2_ref[...])
    dist = _dist_stage(enc_bf, dw1_ref[...], db1_ref[...],
                       dw2_ref[...], db2_ref[...], dw3_ref[...], db3_ref[...])
    ft_out[...] = ft
    enc_out[...] = enc
    noise_out[...] = noise
    dist_out[...] = dist


# ----------------------------------------------------------------------------
# Plain-JAX glue: im2col, time embedding, lane padding, one-hot ids
# ----------------------------------------------------------------------------
def _im2col_patches(x_nchw, k):
    """Non-overlapping kxk patches.  (B,C,H,W) -> (B, P, C*k*k)."""
    b, c, h, w = x_nchw.shape
    x = x_nchw.reshape(b, c, h // k, k, w // k, k)
    x = jnp.transpose(x, (0, 2, 4, 1, 3, 5))          # (B, H/k, W/k, C, k, k)
    return x.reshape(b, (h // k) * (w // k), c * k * k)


def _time_embedding(t, dim):
    half = dim // 2
    freqs = jnp.exp(-jnp.log(10000.0) * jnp.arange(half, dtype=jnp.float32) / half)
    args = t.astype(jnp.float32)[:, None] * freqs[None, :]
    return jnp.concatenate([jnp.sin(args), jnp.cos(args)], axis=-1)


def _pad_cols_bf16(x):
    """Zero-pad the feature (lane) axis to LANE and cast to bf16."""
    x = x.astype(jnp.float32)
    return jnp.pad(x, ((0, 0), (0, LANE - x.shape[1]))).astype(jnp.bfloat16)


def _onehot_ids(inst_ref):
    """(B, SEQ) int ids -> (B*SEQ, LANE) bf16 one-hot (lane-dense)."""
    ids = inst_ref.reshape(B * SEQ, 1).astype(jnp.int32)
    return (ids == jnp.arange(LANE, dtype=jnp.int32)[None, :]).astype(jnp.bfloat16)


# ----------------------------------------------------------------------------
# Parameters: logical weights split/merged and zero-padded once at init.
# bf16 weights for the MXU, f32 biases for the VPU.
# Padded rows/cols are zero, so padded activation lanes stay exactly 0
# end-to-end and slicing back to logical shapes is exact.
# ----------------------------------------------------------------------------
def _pad_weight(w):                      # (K<=128, N<=128) -> (128, 128) bf16
    out = jnp.zeros((LANE, LANE), jnp.float32).at[:w.shape[0], :w.shape[1]].set(w)
    return out.astype(jnp.bfloat16)


def _pad_merged_weight(w_a, w_b):        # split-K pair -> one (256, 128) bf16 weight
    out = jnp.zeros((2 * LANE, LANE), jnp.float32)
    out = out.at[:w_a.shape[0], :w_a.shape[1]].set(w_a)
    out = out.at[LANE:LANE + w_b.shape[0], :w_b.shape[1]].set(w_b)
    return out.astype(jnp.bfloat16)


def _pad_bias(b):
    return jnp.zeros((1, LANE), jnp.float32).at[0, :b.shape[0]].set(b)


def _init_params():
    keys = jax.random.split(jax.random.PRNGKey(42), 20)

    def w(key, shape, scale=0.05):
        return (scale * jax.random.normal(key, shape)).astype(jnp.float32)

    patch_w = w(keys[0], (PATCH_DIM, VIS_FEAT))
    patch_b = w(keys[1], (VIS_FEAT,))
    fuse_w = w(keys[2], (VIS_FEAT + TEXT_DIM, EMB_DIM))
    fuse_b = w(keys[3], (EMB_DIM,))
    tok_tab = w(keys[4], (VOCAB, TEXT_DIM), scale=0.1)
    text_w = w(keys[5], (TEXT_DIM, TEXT_DIM))
    text_b = w(keys[6], (TEXT_DIM,))
    cond_w = w(keys[7], (TIME_EMB + EMB_DIM, EMB_DIM))
    cond_b = w(keys[8], (EMB_DIM,))
    np_w1 = w(keys[9], (T_HORIZON * ACT_DIM + EMB_DIM, NOISE_HID))
    np_b1 = w(keys[10], (NOISE_HID,))
    np_w2 = w(keys[11], (NOISE_HID, T_HORIZON * ACT_DIM))
    np_b2 = w(keys[12], (T_HORIZON * ACT_DIM,))
    d_w1 = w(keys[13], (EMB_DIM, EMB_DIM // 4))
    d_b1 = w(keys[14], (EMB_DIM // 4,))
    d_w2 = w(keys[15], (EMB_DIM // 4, EMB_DIM // 16))
    d_b2 = w(keys[16], (EMB_DIM // 16,))
    d_w3 = w(keys[17], (EMB_DIM // 16, 1))
    d_b3 = w(keys[18], (1,))

    return {
        # text_encoder (stand-in)
        "tok_table": _pad_weight(tok_tab),
        "text_w": _pad_weight(text_w), "text_b": _pad_bias(text_b),
        # vision_encoder
        "patch_w": _pad_weight(patch_w), "patch_b": _pad_bias(patch_b),
        "fuse_w": _pad_merged_weight(fuse_w[:VIS_FEAT], fuse_w[VIS_FEAT:]),
        "fuse_b": _pad_bias(fuse_b),
        # noise_pred_net (stand-in)
        "cond_w": _pad_merged_weight(cond_w[:TIME_EMB], cond_w[TIME_EMB:]),
        "cond_b": _pad_bias(cond_b),
        "np_w1": _pad_merged_weight(np_w1[:T_HORIZON * ACT_DIM], np_w1[T_HORIZON * ACT_DIM:]),
        "np_b1": _pad_bias(np_b1),
        "np_w2": _pad_weight(np_w2), "np_b2": _pad_bias(np_b2),
        # dist_pred_net
        "d_w1": _pad_weight(d_w1), "d_b1": _pad_bias(d_b1),
        "d_w2": _pad_weight(d_w2), "d_b2": _pad_bias(d_b2),
        "d_w3": _pad_weight(d_w3), "d_b3": _pad_bias(d_b3),
    }


# ----------------------------------------------------------------------------
# Wrappers: one gridless pallas_call each (whole arrays VMEM-resident), plus a
# single fused pipeline call for the dependent chain.
# ----------------------------------------------------------------------------
_OUT_ROW = jax.ShapeDtypeStruct((B, LANE), jnp.float32)


@jax.jit
def text_encoder_fwd(p, inst_ref):
    onehot = _onehot_ids(inst_ref)
    out = pl.pallas_call(_text_kernel, out_shape=_OUT_ROW)(
        onehot, p["tok_table"], p["text_w"], p["text_b"])
    return out[:, :TEXT_DIM]


@jax.jit
def vision_encoder_fwd(p, obs_img, feat_text):
    patches = _pad_cols_bf16(_im2col_patches(obs_img, PATCH).reshape(B * P, PATCH_DIM))
    ft = _pad_cols_bf16(feat_text)
    out = pl.pallas_call(_vision_kernel, out_shape=_OUT_ROW)(
        patches, ft, p["patch_w"], p["patch_b"], p["fuse_w"], p["fuse_b"])
    return out[:, :EMB_DIM]


@jax.jit
def noise_pred_fwd(p, sample, timestep, global_cond):
    temb = _pad_cols_bf16(_time_embedding(timestep, TIME_EMB))
    g = _pad_cols_bf16(global_cond)
    x = _pad_cols_bf16(sample.reshape(B, T_HORIZON * ACT_DIM))
    out = pl.pallas_call(_noise_kernel, out_shape=_OUT_ROW)(
        temb, g, x, p["cond_w"], p["cond_b"],
        p["np_w1"], p["np_b1"], p["np_w2"], p["np_b2"])
    return out[:, :T_HORIZON * ACT_DIM].reshape(B, T_HORIZON, ACT_DIM)


@jax.jit
def dist_pred_fwd(p, obsgoal_cond):
    x = _pad_cols_bf16(obsgoal_cond)
    out = pl.pallas_call(_dist_kernel, out_shape=_OUT_ROW)(
        x, p["d_w1"], p["d_b1"], p["d_w2"], p["d_b2"], p["d_w3"], p["d_b3"])
    return out[:, :1]


@jax.jit
def pipeline_fwd(p, obs_img, inst_ref, sample, timestep):
    """Fused fast-path: whole text->vision->noise/dist chain in ONE pallas_call."""
    onehot = _onehot_ids(inst_ref)
    patches = _pad_cols_bf16(_im2col_patches(obs_img, PATCH).reshape(B * P, PATCH_DIM))
    temb = _pad_cols_bf16(_time_embedding(timestep, TIME_EMB))
    x = _pad_cols_bf16(sample.reshape(B, T_HORIZON * ACT_DIM))
    ft, enc, noise, dist = pl.pallas_call(
        _pipeline_kernel,
        out_shape=(_OUT_ROW, _OUT_ROW, _OUT_ROW, _OUT_ROW),
    )(onehot, patches, temb, x,
      p["tok_table"], p["text_w"], p["text_b"],
      p["patch_w"], p["patch_b"], p["fuse_w"], p["fuse_b"],
      p["cond_w"], p["cond_b"], p["np_w1"], p["np_b1"], p["np_w2"], p["np_b2"],
      p["d_w1"], p["d_b1"], p["d_w2"], p["d_b2"], p["d_w3"], p["d_b3"])
    return (ft[:, :TEXT_DIM],
            enc[:, :EMB_DIM],
            noise[:, :T_HORIZON * ACT_DIM].reshape(B, T_HORIZON, ACT_DIM),
            dist[:, :1])


# ----------------------------------------------------------------------------
# LeLaN_clip_BC equivalent (dispatcher + fused pipeline fast-path)
# ----------------------------------------------------------------------------
class LeLaNClipBCPallas:
    def __init__(self, params):
        self.p = params

    def eval_text_encoder(self):
        # stand-in text tower has no dropout / batchnorm state to toggle
        return None

    def forward(self, func_name, **kwargs):
        if func_name == "vision_encoder":
            return vision_encoder_fwd(self.p, kwargs["obs_img"], kwargs["feat_text"])
        elif func_name == "text_encoder":
            return text_encoder_fwd(self.p, kwargs["inst_ref"])
        elif func_name == "noise_pred_net":
            return noise_pred_fwd(self.p, kwargs["sample"], kwargs["timestep"],
                                  kwargs["global_cond"])
        elif func_name == "dist_pred_net":
            return dist_pred_fwd(self.p, kwargs["obsgoal_cond"])
        else:
            raise NotImplementedError

    def forward_pipeline(self, obs_img, inst_ref, sample, timestep):
        return pipeline_fwd(self.p, obs_img, inst_ref, sample, timestep)


# ----------------------------------------------------------------------------
if __name__ == "__main__":
    params = _init_params()
    model = LeLaNClipBCPallas(params)

    key = jax.random.PRNGKey(0)
    k_img, k_tok, k_smp, k_t = jax.random.split(key, 4)

    obs_img = jax.random.normal(k_img, (B, C, H, W), dtype=jnp.float32)
    inst_ref = jax.random.randint(k_tok, (B, SEQ), 0, VOCAB)
    sample = jax.random.normal(k_smp, (B, T_HORIZON, ACT_DIM), dtype=jnp.float32)
    timestep = jax.random.randint(k_t, (B,), 0, 100)

    # --- fused pipeline: one pallas_call for the whole dependent chain ---
    ft_f, enc_f, noise_f, dist_f = model.forward_pipeline(obs_img, inst_ref,
                                                          sample, timestep)

    # --- dispatcher path (original module semantics), used for validation ---
    feat_text = model.forward("text_encoder", inst_ref=inst_ref)
    obs_enc = model.forward("vision_encoder", obs_img=obs_img, feat_text=feat_text)
    noise = model.forward("noise_pred_net", sample=sample, timestep=timestep,
                          global_cond=obs_enc)
    dist = model.forward("dist_pred_net", obsgoal_cond=obs_enc)

    jax.block_until_ready((ft_f, enc_f, noise_f, dist_f,
                           feat_text, obs_enc, noise, dist))

    assert feat_text.shape == (B, TEXT_DIM)
    assert obs_enc.shape == (B, EMB_DIM)
    assert noise.shape == (B, T_HORIZON, ACT_DIM)
    assert dist.shape == (B, 1)

    for fused, branch in ((ft_f, feat_text), (enc_f, obs_enc),
                          (noise_f, noise), (dist_f, dist)):
        assert fused.shape == branch.shape
        assert bool(jnp.all(jnp.isfinite(fused)))
        assert bool(jnp.all(jnp.isfinite(branch)))
        assert bool(jnp.allclose(fused, branch, rtol=2e-2, atol=2e-3))

    print("KERNEL_OK")
</pallas_src>

<mosaic_0001>
module attributes {stable_mosaic.version = 11 : i64} {
  func.func @_pipeline_kernel(%arg0: memref<16x128xbf16, #tpu.memory_space<vmem>>, %arg1: memref<32x128xbf16, #tpu.memory_space<vmem>>, %arg2: memref<2x128xbf16, #tpu.memory_space<vmem>>, %arg3: memref<2x128xbf16, #tpu.memory_space<vmem>>, %arg4: memref<128x128xbf16, #tpu.memory_space<vmem>>, %arg5: memref<128x128xbf16, #tpu.memory_space<vmem>>, %arg6: memref<1x128xf32, #tpu.memory_space<vmem>>, %arg7: memref<128x128xbf16, #tpu.memory_space<vmem>>, %arg8: memref<1x128xf32, #tpu.memory_space<vmem>>, %arg9: memref<256x128xbf16, #tpu.memory_space<vmem>>, %arg10: memref<1x128xf32, #tpu.memory_space<vmem>>, %arg11: memref<256x128xbf16, #tpu.memory_space<vmem>>, %arg12: memref<1x128xf32, #tpu.memory_space<vmem>>, %arg13: memref<256x128xbf16, #tpu.memory_space<vmem>>, %arg14: memref<1x128xf32, #tpu.memory_space<vmem>>, %arg15: memref<128x128xbf16, #tpu.memory_space<vmem>>, %arg16: memref<1x128xf32, #tpu.memory_space<vmem>>, %arg17: memref<128x128xbf16, #tpu.memory_space<vmem>>, %arg18: memref<1x128xf32, #tpu.memory_space<vmem>>, %arg19: memref<128x128xbf16, #tpu.memory_space<vmem>>, %arg20: memref<1x128xf32, #tpu.memory_space<vmem>>, %arg21: memref<128x128xbf16, #tpu.memory_space<vmem>>, %arg22: memref<1x128xf32, #tpu.memory_space<vmem>>, %arg23: memref<2x128xf32, #tpu.memory_space<vmem>>, %arg24: memref<2x128xf32, #tpu.memory_space<vmem>>, %arg25: memref<2x128xf32, #tpu.memory_space<vmem>>, %arg26: memref<2x128xf32, #tpu.memory_space<vmem>>) attributes {dimension_semantics = [], scalar_prefetch = 0 : i64, scratch_operands = 0 : i64, tpu.core_type = #tpu.core_type<tc>} {
    %c0 = arith.constant 0 : index
    %c0_0 = arith.constant 0 : index
    %0 = vector.load %arg0[%c0, %c0_0] : memref<16x128xbf16, #tpu.memory_space<vmem>>, vector<16x128xbf16>
    %c0_1 = arith.constant 0 : index
    %c0_2 = arith.constant 0 : index
    %1 = vector.load %arg4[%c0_1, %c0_2] : memref<128x128xbf16, #tpu.memory_space<vmem>>, vector<128x128xbf16>
    %c0_3 = arith.constant 0 : index
    %c0_4 = arith.constant 0 : index
    %2 = vector.load %arg5[%c0_3, %c0_4] : memref<128x128xbf16, #tpu.memory_space<vmem>>, vector<128x128xbf16>
    %c0_5 = arith.constant 0 : index
    %c0_6 = arith.constant 0 : index
    %3 = vector.load %arg6[%c0_5, %c0_6] : memref<1x128xf32, #tpu.memory_space<vmem>>, vector<1x128xf32>
    %cst = arith.constant dense<0.000000e+00> : vector<16x128xf32>
    %4 = tpu.matmul %0, %1, %cst {dimension_numbers = #tpu.dot_dimension_numbers<[1], [0], [0], [1], [0, 0, 1, 1], [], []>} : vector<16x128xbf16>, vector<128x128xbf16>, vector<16x128xf32> -> vector<16x128xf32>
    %5 = vector.shape_cast %4 : vector<16x128xf32> to vector<2x8x128xf32>
    %cst_7 = arith.constant dense<0.000000e+00> : vector<2x128xf32>
    %6 = vector.multi_reduction <add>, %5, %cst_7 [1] : vector<2x8x128xf32> to vector<2x128xf32>
    %cst_8 = arith.constant 8.000000e+00 : f32
    %7 = vector.broadcast %cst_8 : f32 to vector<2x128xf32>
    %8 = arith.divf %6, %7 : vector<2x128xf32>
    %9 = arith.truncf %8 : vector<2x128xf32> to vector<2x128xbf16>
    %cst_9 = arith.constant dense<0.000000e+00> : vector<2x128xf32>
    %10 = tpu.matmul %9, %2, %cst_9 {dimension_numbers = #tpu.dot_dimension_numbers<[1], [0], [0], [1], [0, 0, 1, 1], [], []>} : vector<2x128xbf16>, vector<128x128xbf16>, vector<2x128xf32> -> vector<2x128xf32>
    %11 = vector.broadcast %3 : vector<1x128xf32> to vector<2x128xf32>
    %12 = arith.addf %10, %11 : vector<2x128xf32>
    %c0_10 = arith.constant 0 : index
    %c0_11 = arith.constant 0 : index
    %13 = vector.load %arg1[%c0_10, %c0_11] : memref<32x128xbf16, #tpu.memory_space<vmem>>, vector<32x128xbf16>
    %14 = arith.truncf %12 : vector<2x128xf32> to vector<2x128xbf16>
    %c0_12 = arith.constant 0 : index
    %c0_13 = arith.constant 0 : index
    %15 = vector.load %arg7[%c0_12, %c0_13] : memref<128x128xbf16, #tpu.memory_space<vmem>>, vector<128x128xbf16>
    %c0_14 = arith.constant 0 : index
    %c0_15 = arith.constant 0 : index
    %16 = vector.load %arg8[%c0_14, %c0_15] : memref<1x128xf32, #tpu.memory_space<vmem>>, vector<1x128xf32>
    %c0_16 = arith.constant 0 : index
    %c0_17 = arith.constant 0 : index
    %17 = vector.load %arg9[%c0_16, %c0_17] : memref<256x128xbf16, #tpu.memory_space<vmem>>, vector<256x128xbf16>
    %c0_18 = arith.constant 0 : index
    %c0_19 = arith.constant 0 : index
    %18 = vector.load %arg10[%c0_18, %c0_19] : memref<1x128xf32, #tpu.memory_space<vmem>>, vector<1x128xf32>
    %cst_20 = arith.constant dense<0.000000e+00> : vector<32x128xf32>
    %19 = tpu.matmul %13, %15, %cst_20 {dimension_numbers = #tpu.dot_dimension_numbers<[1], [0], [0], [1], [0, 0, 1, 1], [], []>} : vector<32x128xbf16>, vector<128x128xbf16>, vector<32x128xf32> -> vector<32x128xf32>
    %20 = vector.broadcast %16 : vector<1x128xf32> to vector<32x128xf32>
    %21 = arith.addf %19, %20 : vector<32x128xf32>
    %cst_21 = arith.constant 0.000000e+00 : f32
    %22 = vector.broadcast %cst_21 : f32 to vector<32x128xf32>
    %23 = arith.maximumf %21, %22 : vector<32x128xf32>
    %24 = vector.shape_cast %23 : vector<32x128xf32> to vector<2x16x128xf32>
    %cst_22 = arith.constant dense<0.000000e+00> : vector<2x128xf32>
    %25 = vector.multi_reduction <add>, %24, %cst_22 [1] : vector<2x16x128xf32> to vector<2x128xf32>
    %cst_23 = arith.constant 1.600000e+01 : f32
    %26 = vector.broadcast %cst_23 : f32 to vector<2x128xf32>
    %27 = arith.divf %25, %26 : vector<2x128xf32>
    %28 = arith.truncf %27 : vector<2x128xf32> to vector<2x128xbf16>
    %29 = tpu.concatenate %28, %14 in 1 : vector<2x128xbf16>, vector<2x128xbf16> -> vector<2x256xbf16>
    %cst_24 = arith.constant dense<0.000000e+00> : vector<2x128xf32>
    %30 = tpu.matmul %29, %17, %cst_24 {dimension_numbers = #tpu.dot_dimension_numbers<[1], [0], [0], [1], [0, 0, 1, 1], [], []>} : vector<2x256xbf16>, vector<256x128xbf16>, vector<2x128xf32> -> vector<2x128xf32>
    %31 = vector.broadcast %18 : vector<1x128xf32> to vector<2x128xf32>
    %32 = arith.addf %30, %31 : vector<2x128xf32>
    %33 = arith.truncf %32 : vector<2x128xf32> to vector<2x128xbf16>
    %c0_25 = arith.constant 0 : index
    %c0_26 = arith.constant 0 : index
    %34 = vector.load %arg2[%c0_25, %c0_26] : memref<2x128xbf16, #tpu.memory_space<vmem>>, vector<2x128xbf16>
    %c0_27 = arith.constant 0 : index
    %c0_28 = arith.constant 0 : index
    %35 = vector.load %arg3[%c0_27, %c0_28] : memref<2x128xbf16, #tpu.memory_space<vmem>>, vector<2x128xbf16>
    %c0_29 = arith.constant 0 : index
    %c0_30 = arith.constant 0 : index
    %36 = vector.load %arg11[%c0_29, %c0_30] : memref<256x128xbf16, #tpu.memory_space<vmem>>, vector<256x128xbf16>
    %c0_31 = arith.constant 0 : index
    %c0_32 = arith.constant 0 : index
    %37 = vector.load %arg12[%c0_31, %c0_32] : memref<1x128xf32, #tpu.memory_space<vmem>>, vector<1x128xf32>
    %c0_33 = arith.constant 0 : index
    %c0_34 = arith.constant 0 : index
    %38 = vector.load %arg13[%c0_33, %c0_34] : memref<256x128xbf16, #tpu.memory_space<vmem>>, vector<256x128xbf16>
    %c0_35 = arith.constant 0 : index
    %c0_36 = arith.constant 0 : index
    %39 = vector.load %arg14[%c0_35, %c0_36] : memref<1x128xf32, #tpu.memory_space<vmem>>, vector<1x128xf32>
    %c0_37 = arith.constant 0 : index
    %c0_38 = arith.constant 0 : index
    %40 = vector.load %arg15[%c0_37, %c0_38] : memref<128x128xbf16, #tpu.memory_space<vmem>>, vector<128x128xbf16>
    %c0_39 = arith.constant 0 : index
    %c0_40 = arith.constant 0 : index
    %41 = vector.load %arg16[%c0_39, %c0_40] : memref<1x128xf32, #tpu.memory_space<vmem>>, vector<1x128xf32>
    %42 = tpu.concatenate %34, %33 in 1 : vector<2x128xbf16>, vector<2x128xbf16> -> vector<2x256xbf16>
    %cst_41 = arith.constant dense<0.000000e+00> : vector<2x128xf32>
    %43 = tpu.matmul %42, %36, %cst_41 {dimension_numbers = #tpu.dot_dimension_numbers<[1], [0], [0], [1], [0, 0, 1, 1], [], []>} : vector<2x256xbf16>, vector<256x128xbf16>, vector<2x128xf32> -> vector<2x128xf32>
    %44 = vector.broadcast %37 : vector<1x128xf32> to vector<2x128xf32>
    %45 = arith.addf %43, %44 : vector<2x128xf32>
    %cst_42 = arith.constant 0.000000e+00 : f32
    %46 = vector.broadcast %cst_42 : f32 to vector<2x128xf32>
    %47 = arith.maximumf %45, %46 : vector<2x128xf32>
    %48 = arith.truncf %47 : vector<2x128xf32> to vector<2x128xbf16>
    %49 = tpu.concatenate %35, %48 in 1 : vector<2x128xbf16>, vector<2x128xbf16> -> vector<2x256xbf16>
    %cst_43 = arith.constant dense<0.000000e+00> : vector<2x128xf32>
    %50 = tpu.matmul %49, %38, %cst_43 {dimension_numbers = #tpu.dot_dimension_numbers<[1], [0], [0], [1], [0, 0, 1, 1], [], []>} : vector<2x256xbf16>, vector<256x128xbf16>, vector<2x128xf32> -> vector<2x128xf32>
    %51 = vector.broadcast %39 : vector<1x128xf32> to vector<2x128xf32>
    %52 = arith.addf %50, %51 : vector<2x128xf32>
    %cst_44 = arith.constant 0.000000e+00 : f32
    %53 = vector.broadcast %cst_44 : f32 to vector<2x128xf32>
    %54 = arith.maximumf %52, %53 : vector<2x128xf32>
    %55 = arith.truncf %54 : vector<2x128xf32> to vector<2x128xbf16>
    %cst_45 = arith.constant dense<0.000000e+00> : vector<2x128xf32>
    %56 = tpu.matmul %55, %40, %cst_45 {dimension_numbers = #tpu.dot_dimension_numbers<[1], [0], [0], [1], [0, 0, 1, 1], [], []>} : vector<2x128xbf16>, vector<128x128xbf16>, vector<2x128xf32> -> vector<2x128xf32>
    %57 = vector.broadcast %41 : vector<1x128xf32> to vector<2x128xf32>
    %58 = arith.addf %56, %57 : vector<2x128xf32>
    %c0_46 = arith.constant 0 : index
    %c0_47 = arith.constant 0 : index
    %59 = vector.load %arg17[%c0_46, %c0_47] : memref<128x128xbf16, #tpu.memory_space<vmem>>, vector<128x128xbf16>
    %c0_48 = arith.constant 0 : index
    %c0_49 = arith.constant 0 : index
    %60 = vector.load %arg18[%c0_48, %c0_49] : memref<1x128xf32, #tpu.memory_space<vmem>>, vector<1x128xf32>
    %c0_50 = arith.constant 0 : index
    %c0_51 = arith.constant 0 : index
    %61 = vector.load %arg19[%c0_50, %c0_51] : memref<128x128xbf16, #tpu.memory_space<vmem>>, vector<128x128xbf16>
    %c0_52 = arith.constant 0 : index
    %c0_53 = arith.constant 0 : index
    %62 = vector.load %arg20[%c0_52, %c0_53] : memref<1x128xf32, #tpu.memory_space<vmem>>, vector<1x128xf32>
    %c0_54 = arith.constant 0 : index
    %c0_55 = arith.constant 0 : index
    %63 = vector.load %arg21[%c0_54, %c0_55] : memref<128x128xbf16, #tpu.memory_space<vmem>>, vector<128x128xbf16>
    %c0_56 = arith.constant 0 : index
    %c0_57 = arith.constant 0 : index
    %64 = vector.load %arg22[%c0_56, %c0_57] : memref<1x128xf32, #tpu.memory_space<vmem>>, vector<1x128xf32>
    %cst_58 = arith.constant dense<0.000000e+00> : vector<2x128xf32>
    %65 = tpu.matmul %33, %59, %cst_58 {dimension_numbers = #tpu.dot_dimension_numbers<[1], [0], [0], [1], [0, 0, 1, 1], [], []>} : vector<2x128xbf16>, vector<128x128xbf16>, vector<2x128xf32> -> vector<2x128xf32>
    %66 = vector.broadcast %60 : vector<1x128xf32> to vector<2x128xf32>
    %67 = arith.addf %65, %66 : vector<2x128xf32>
    %cst_59 = arith.constant 0.000000e+00 : f32
    %68 = vector.broadcast %cst_59 : f32 to vector<2x128xf32>
    %69 = arith.maximumf %67, %68 : vector<2x128xf32>
    %70 = arith.truncf %69 : vector<2x128xf32> to vector<2x128xbf16>
    %cst_60 = arith.constant dense<0.000000e+00> : vector<2x128xf32>
    %71 = tpu.matmul %70, %61, %cst_60 {dimension_numbers = #tpu.dot_dimension_numbers<[1], [0], [0], [1], [0, 0, 1, 1], [], []>} : vector<2x128xbf16>, vector<128x128xbf16>, vector<2x128xf32> -> vector<2x128xf32>
    %72 = vector.broadcast %62 : vector<1x128xf32> to vector<2x128xf32>
    %73 = arith.addf %71, %72 : vector<2x128xf32>
    %cst_61 = arith.constant 0.000000e+00 : f32
    %74 = vector.broadcast %cst_61 : f32 to vector<2x128xf32>
    %75 = arith.maximumf %73, %74 : vector<2x128xf32>
    %76 = arith.truncf %75 : vector<2x128xf32> to vector<2x128xbf16>
    %cst_62 = arith.constant dense<0.000000e+00> : vector<2x128xf32>
    %77 = tpu.matmul %76, %63, %cst_62 {dimension_numbers = #tpu.dot_dimension_numbers<[1], [0], [0], [1], [0, 0, 1, 1], [], []>} : vector<2x128xbf16>, vector<128x128xbf16>, vector<2x128xf32> -> vector<2x128xf32>
    %78 = vector.broadcast %64 : vector<1x128xf32> to vector<2x128xf32>
    %79 = arith.addf %77, %78 : vector<2x128xf32>
    %c0_63 = arith.constant 0 : index
    %c0_64 = arith.constant 0 : index
    %80 = vector.load %arg23[%c0_63, %c0_64] : memref<2x128xf32, #tpu.memory_space<vmem>>, vector<2x128xf32>
    tpu.vector_store %arg23[%c0_63, %c0_64], %12 {strides = array<i32>} : memref<2x128xf32, #tpu.memory_space<vmem>>, vector<2x128xf32>,
    %c0_65 = arith.constant 0 : index
    %c0_66 = arith.constant 0 : index
    %81 = vector.load %arg24[%c0_65, %c0_66] : memref<2x128xf32, #tpu.memory_space<vmem>>, vector<2x128xf32>
    tpu.vector_store %arg24[%c0_65, %c0_66], %32 {strides = array<i32>} : memref<2x128xf32, #tpu.memory_space<vmem>>, vector<2x128xf32>,
    %c0_67 = arith.constant 0 : index
    %c0_68 = arith.constant 0 : index
    %82 = vector.load %arg25[%c0_67, %c0_68] : memref<2x128xf32, #tpu.memory_space<vmem>>, vector<2x128xf32>
    tpu.vector_store %arg25[%c0_67, %c0_68], %58 {strides = array<i32>} : memref<2x128xf32, #tpu.memory_space<vmem>>, vector<2x128xf32>,
    %c0_69 = arith.constant 0 : index
    %c0_70 = arith.constant 0 : index
    %83 = vector.load %arg26[%c0_69, %c0_70] : memref<2x128xf32, #tpu.memory_space<vmem>>, vector<2x128xf32>
    tpu.vector_store %arg26[%c0_69, %c0_70], %79 {strides = array<i32>} : memref<2x128xf32, #tpu.memory_space<vmem>>, vector<2x128xf32>,
    return
  }
}

</mosaic_0001>

<llo_original>
// kernel: eq.8
$region0: #{eq.8}
  %s0 = inlined_call_operand.vmem [shape: s32[2,8], index: 0, kind: input, shape index: {}]
  %s1 = inlined_call_operand.vmem [shape: s32[16], index: 1, kind: output, shape index: {}]
  $region1: #{eq.8} parent=0
    #allocation0 [shape = 'u8[4096]{0}', space=vmem, size = 0x1000, scoped, tag = 'scoped mem for output reshape']
    #allocation1 [shape = 'u8[4096]{0}', space=vmem, size = 0x1000, scoped, tag = 'scoped mem for input reshape']
    %s3 = sshllo.u32 0, 2
    %v4 = vld [vmem:[%s0] sm:%s3]
    %5 = vst [vmem:[#allocation1] sm:%s3] %v4
    %v6 = vld [vmem:[#allocation1] sm:$0x1]
    %vm7 = vcmask 64512
    %8 = vst.msk [vmem:[#allocation0] sm:$0x1] %vm7, %v6
    %s9 = scalar_lea.vmem [#allocation1], 1
    %v10 = vld [vmem:[%s9] sm:$0x1]
    %11 = vrot.lane.b32.xlu0 %v10, 8
    %v12 = vpop.permute.xlu0 %11
    %vm13 = vcmask 130112
    %14 = vst.msk [vmem:[#allocation0] sm:$0x1] %vm13, %v12
    %s16 = sshllo.u32 0, 1
    %v18 = vld [vmem:[#allocation0] sm:%s16]
    %s19 = sshllo.u32 0, 1
    %20 = vst [vmem:[%s1] sm:%s19] %v18

// kernel: pipeline_fwd.1
$region0: #{pipeline_fwd.1}
  #allocation0 [shape = 'u32[]', space=smem, size = 0x4, offset = 0x4, fixed_abs, tag = 'smem constant byte address 0x4 - core index']
  #allocation1 [shape = 'u32[144,128]{1,0:T(1,128)}', space=vmem, size = 0x12000, scoped, tag = 'internal scratch']
  %s0 = inlined_call_operand.vmem [shape: bf16[16,128], index: 0, kind: input, shape index: {}]
  %s1 = inlined_call_operand.vmem [shape: bf16[32,128], index: 1, kind: input, shape index: {}]
  %s2 = inlined_call_operand.vmem [shape: bf16[2,128], index: 2, kind: input, shape index: {}]
  %s3 = inlined_call_operand.vmem [shape: bf16[2,128], index: 3, kind: input, shape index: {}]
  %s4 = inlined_call_operand.vmem [shape: bf16[128,128], index: 4, kind: input, shape index: {}]
  %s5 = inlined_call_operand.vmem [shape: bf16[128,128], index: 5, kind: input, shape index: {}]
  %s6 = inlined_call_operand.vmem [shape: f32[1,128], index: 6, kind: input, shape index: {}]
  %s7 = inlined_call_operand.vmem [shape: bf16[128,128], index: 7, kind: input, shape index: {}]
  %s8 = inlined_call_operand.vmem [shape: f32[1,128], index: 8, kind: input, shape index: {}]
  %s9 = inlined_call_operand.vmem [shape: bf16[256,128], index: 9, kind: input, shape index: {}]
  %s10 = inlined_call_operand.vmem [shape: f32[1,128], index: 10, kind: input, shape index: {}]
  %s11 = inlined_call_operand.vmem [shape: bf16[256,128], index: 11, kind: input, shape index: {}]
  %s12 = inlined_call_operand.vmem [shape: f32[1,128], index: 12, kind: input, shape index: {}]
  %s13 = inlined_call_operand.vmem [shape: bf16[256,128], index: 13, kind: input, shape index: {}]
  %s14 = inlined_call_operand.vmem [shape: f32[1,128], index: 14, kind: input, shape index: {}]
  %s15 = inlined_call_operand.vmem [shape: bf16[128,128], index: 15, kind: input, shape index: {}]
  %s16 = inlined_call_operand.vmem [shape: f32[1,128], index: 16, kind: input, shape index: {}]
  %s17 = inlined_call_operand.vmem [shape: bf16[128,128], index: 17, kind: input, shape index: {}]
  %s18 = inlined_call_operand.vmem [shape: f32[1,128], index: 18, kind: input, shape index: {}]
  %s19 = inlined_call_operand.vmem [shape: bf16[128,128], index: 19, kind: input, shape index: {}]
  %s20 = inlined_call_operand.vmem [shape: f32[1,128], index: 20, kind: input, shape index: {}]
  %s21 = inlined_call_operand.vmem [shape: bf16[128,128], index: 21, kind: input, shape index: {}]
  %s22 = inlined_call_operand.vmem [shape: f32[1,128], index: 22, kind: input, shape index: {}]
  %s23 = inlined_call_operand.hbm [shape: f32[2,128], index: 23, kind: output, shape index: {0}]
  %s24 = inlined_call_operand.hbm [shape: f32[2,128], index: 24, kind: output, shape index: {1}]
  %s25 = inlined_call_operand.vmem [shape: f32[2,128], index: 25, kind: output, shape index: {2}]
  %s26 = inlined_call_operand.vmem [shape: f32[2,128], index: 26, kind: output, shape index: {3}]
  %27 = xla_tuple %s23, %s24, %s25, %s26
  %s28 = sld [smem:[#allocation0]]
  $region126: #{pipeline_fwd.1} parent=0
    _
  %s30 = ssub.s32 1, %s28
  %s31 = scalar_select 0, %s30, %s28
  $region1: #{pipeline_fwd.1} parent=0
    #allocation2 [shape = 'u8[1024]{0}', space=vmem, size = 0x400, scoped, tag = 'output window, operand 0, single buffered']
    #allocation3 [shape = 's32[1]{0}', space=sflag, size = 0x4, scoped, tag = 'scoped memory for pipeline_fwd.1']
    #allocation4 [shape = 'u8[1024]{0}', space=vmem, size = 0x400, scoped, tag = 'output window, operand 1, single buffered']
    #allocation5 [shape = 's32[1]{0}', space=sflag, size = 0x4, scoped, tag = 'scoped memory for pipeline_fwd.1']
    %32 = vsyncpa [#allocation3], 0
    %33 = vsyncpa [#allocation5], 0
    // Predicated region
    $region2: #{pipeline_fwd.1} parent=1 // pred_check
      _
    $region3: #{pipeline_fwd.1} parent=1 // pred_check_branch
      %35 = sbr.rel (0) target = $region5
    $region4: #{pipeline_fwd.1} parent=1 // pred_region
      _
    $region5: #{pipeline_fwd.1} parent=1 // pred_fallthru
      _
    // Predicated region
    $region6: #{pipeline_fwd.1} parent=1 // pred_check
      _
    $region7: #{pipeline_fwd.1} parent=1 // pred_check_branch
      %37 = sbr.rel (0) target = $region9
    $region8: #{pipeline_fwd.1} parent=1 // pred_region
      _
    $region9: #{pipeline_fwd.1} parent=1 // pred_fallthru
      _
    // Predicated region
    $region10: #{pipeline_fwd.1} parent=1 // pred_check
      _
    $region11: #{pipeline_fwd.1} parent=1 // pred_check_branch
      %39 = sbr.rel (0) target = $region13
    $region12: #{pipeline_fwd.1} parent=1 // pred_region
      _
    $region13: #{pipeline_fwd.1} parent=1 // pred_fallthru
      _
    // Predicated region
    $region14: #{pipeline_fwd.1} parent=1 // pred_check
      _
    $region15: #{pipeline_fwd.1} parent=1 // pred_check_branch
      %41 = sbr.rel (0) target = $region17
    $region16: #{pipeline_fwd.1} parent=1 // pred_region
      _
    $region17: #{pipeline_fwd.1} parent=1 // pred_fallthru
      _
    // Predicated region
    $region18: #{pipeline_fwd.1} parent=1 // pred_check
      _
    $region19: #{pipeline_fwd.1} parent=1 // pred_check_branch
      %43 = sbr.rel (0) target = $region21
    $region20: #{pipeline_fwd.1} parent=1 // pred_region
      _
    $region21: #{pipeline_fwd.1} parent=1 // pred_fallthru
      _
    // Predicated region
    $region22: #{pipeline_fwd.1} parent=1 // pred_check
      _
    $region23: #{pipeline_fwd.1} parent=1 // pred_check_branch
      %45 = sbr.rel (0) target = $region25
    $region24: #{pipeline_fwd.1} parent=1 // pred_region
      _
    $region25: #{pipeline_fwd.1} parent=1 // pred_fallthru
      _
    // Predicated region
    $region26: #{pipeline_fwd.1} parent=1 // pred_check
      _
    $region27: #{pipeline_fwd.1} parent=1 // pred_check_branch
      %47 = sbr.rel (0) target = $region29
    $region28: #{pipeline_fwd.1} parent=1 // pred_region
      _
    $region29: #{pipeline_fwd.1} parent=1 // pred_fallthru
      _
    // Predicated region
    $region30: #{pipeline_fwd.1} parent=1 // pred_check
      _
    $region31: #{pipeline_fwd.1} parent=1 // pred_check_branch
      %49 = sbr.rel (0) target = $region33
    $region32: #{pipeline_fwd.1} parent=1 // pred_region
      _
    $region33: #{pipeline_fwd.1} parent=1 // pred_fallthru
      _
    // Predicated region
    $region34: #{pipeline_fwd.1} parent=1 // pred_check
      _
    $region35: #{pipeline_fwd.1} parent=1 // pred_check_branch
      %51 = sbr.rel (0) target = $region37
    $region36: #{pipeline_fwd.1} parent=1 // pred_region
      _
    $region37: #{pipeline_fwd.1} parent=1 // pred_fallthru
      _
    // Predicated region
    $region38: #{pipeline_fwd.1} parent=1 // pred_check
      _
    $region39: #{pipeline_fwd.1} parent=1 // pred_check_branch
      %53 = sbr.rel (0) target = $region41
    $region40: #{pipeline_fwd.1} parent=1 // pred_region
      _
    $region41: #{pipeline_fwd.1} parent=1 // pred_fallthru
      _
    // Predicated region
    $region42: #{pipeline_fwd.1} parent=1 // pred_check
      _
    $region43: #{pipeline_fwd.1} parent=1 // pred_check_branch
      %55 = sbr.rel (0) target = $region45
    $region44: #{pipeline_fwd.1} parent=1 // pred_region
      _
    $region45: #{pipeline_fwd.1} parent=1 // pred_fallthru
      _
    // Predicated region
    $region46: #{pipeline_fwd.1} parent=1 // pred_check
      _
    $region47: #{pipeline_fwd.1} parent=1 // pred_check_branch
      %57 = sbr.rel (0) target = $region49
    $region48: #{pipeline_fwd.1} parent=1 // pred_region
      _
    $region49: #{pipeline_fwd.1} parent=1 // pred_fallthru
      _
    // Predicated region
    $region50: #{pipeline_fwd.1} parent=1 // pred_check
      _
    $region51: #{pipeline_fwd.1} parent=1 // pred_check_branch
      %59 = sbr.rel (0) target = $region53
    $region52: #{pipeline_fwd.1} parent=1 // pred_region
      _
    $region53: #{pipeline_fwd.1} parent=1 // pred_fallthru
      _
    // Predicated region
    $region54: #{pipeline_fwd.1} parent=1 // pred_check
      _
    $region55: #{pipeline_fwd.1} parent=1 // pred_check_branch
      %61 = sbr.rel (0) target = $region57
    $region56: #{pipeline_fwd.1} parent=1 // pred_region
      _
    $region57: #{pipeline_fwd.1} parent=1 // pred_fallthru
      _
    // Predicated region
    $region58: #{pipeline_fwd.1} parent=1 // pred_check
      _
    $region59: #{pipeline_fwd.1} parent=1 // pred_check_branch
      %63 = sbr.rel (0) target = $region61
    $region60: #{pipeline_fwd.1} parent=1 // pred_region
      _
    $region61: #{pipeline_fwd.1} parent=1 // pred_fallthru
      _
    // Predicated region
    $region62: #{pipeline_fwd.1} parent=1 // pred_check
      _
    $region63: #{pipeline_fwd.1} parent=1 // pred_check_branch
      %65 = sbr.rel (0) target = $region65
    $region64: #{pipeline_fwd.1} parent=1 // pred_region
      _
    $region65: #{pipeline_fwd.1} parent=1 // pred_fallthru
      _
    // Predicated region
    $region66: #{pipeline_fwd.1} parent=1 // pred_check
      _
    $region67: #{pipeline_fwd.1} parent=1 // pred_check_branch
      %67 = sbr.rel (0) target = $region69
    $region68: #{pipeline_fwd.1} parent=1 // pred_region
      _
    $region69: #{pipeline_fwd.1} parent=1 // pred_fallthru
      _
    // Predicated region
    $region70: #{pipeline_fwd.1} parent=1 // pred_check
      _
    $region71: #{pipeline_fwd.1} parent=1 // pred_check_branch
      %69 = sbr.rel (0) target = $region73
    $region72: #{pipeline_fwd.1} parent=1 // pred_region
      _
    $region73: #{pipeline_fwd.1} parent=1 // pred_fallthru
      _
    // Predicated region
    $region74: #{pipeline_fwd.1} parent=1 // pred_check
      _
    $region75: #{pipeline_fwd.1} parent=1 // pred_check_branch
      %71 = sbr.rel (0) target = $region77
    $region76: #{pipeline_fwd.1} parent=1 // pred_region
      _
    $region77: #{pipeline_fwd.1} parent=1 // pred_fallthru
      _
    // Predicated region
    $region78: #{pipeline_fwd.1} parent=1 // pred_check
      _
    $region79: #{pipeline_fwd.1} parent=1 // pred_check_branch
      %73 = sbr.rel (0) target = $region81
    $region80: #{pipeline_fwd.1} parent=1 // pred_region
      _
    $region81: #{pipeline_fwd.1} parent=1 // pred_fallthru
      _
    // Predicated region
    $region82: #{pipeline_fwd.1} parent=1 // pred_check
      _
    $region83: #{pipeline_fwd.1} parent=1 // pred_check_branch
      %75 = sbr.rel (0) target = $region85
    $region84: #{pipeline_fwd.1} parent=1 // pred_region
      _
    $region85: #{pipeline_fwd.1} parent=1 // pred_fallthru
      _
    // Predicated region
    $region86: #{pipeline_fwd.1} parent=1 // pred_check
      _
    $region87: #{pipeline_fwd.1} parent=1 // pred_check_branch
      %77 = sbr.rel (0) target = $region89
    $region88: #{pipeline_fwd.1} parent=1 // pred_region
      _
    $region89: #{pipeline_fwd.1} parent=1 // pred_fallthru
      _
    // Predicated region
    $region90: #{pipeline_fwd.1} parent=1 // pred_check
      _
    $region91: #{pipeline_fwd.1} parent=1 // pred_check_branch
      %79 = sbr.rel (0) target = $region93
    $region92: #{pipeline_fwd.1} parent=1 // pred_region
      _
    $region93: #{pipeline_fwd.1} parent=1 // pred_fallthru
      _
    %v81 = vld [vmem:[%s0] sm:$0xf]
    %v82 = vld [vmem:[%s0 + $0x4] sm:$0xf]
    %v83 = vld [vmem:[%s4] sm:$0xf]
    %v84 = vld [vmem:[%s4 + $0x4] sm:$0xf]
    %v85 = vld [vmem:[%s4 + $0x8] sm:$0xf]
    %v86 = vld [vmem:[%s4 + $0xc] sm:$0xf]
    %v87 = vld [vmem:[%s4 + $0x10] sm:$0xf]
    %v88 = vld [vmem:[%s4 + $0x14] sm:$0xf]
    %v89 = vld [vmem:[%s4 + $0x18] sm:$0xf]
    %v90 = vld [vmem:[%s4 + $0x1c] sm:$0xf]
    %v91 = vld [vmem:[%s4 + $0x20] sm:$0xf]
    %v92 = vld [vmem:[%s4 + $0x24] sm:$0xf]
    %v93 = vld [vmem:[%s4 + $0x28] sm:$0xf]
    %v94 = vld [vmem:[%s4 + $0x2c] sm:$0xf]
    %v95 = vld [vmem:[%s4 + $0x30] sm:$0xf]
    %v96 = vld [vmem:[%s4 + $0x34] sm:$0xf]
    %v97 = vld [vmem:[%s4 + $0x38] sm:$0xf]
    %v98 = vld [vmem:[%s4 + $0x3c] sm:$0xf]
    %v99 = vld [vmem:[%s5] sm:$0xf]
    %v100 = vld [vmem:[%s5 + $0x4] sm:$0xf]
    %v101 = vld [vmem:[%s5 + $0x8] sm:$0xf]
    %v102 = vld [vmem:[%s5 + $0xc] sm:$0xf]
    %v103 = vld [vmem:[%s5 + $0x10] sm:$0xf]
    %v104 = vld [vmem:[%s5 + $0x14] sm:$0xf]
    %v105 = vld [vmem:[%s5 + $0x18] sm:$0xf]
    %v106 = vld [vmem:[%s5 + $0x1c] sm:$0xf]
    %v107 = vld [vmem:[%s5 + $0x20] sm:$0xf]
    %v108 = vld [vmem:[%s5 + $0x24] sm:$0xf]
    %v109 = vld [vmem:[%s5 + $0x28] sm:$0xf]
    %v110 = vld [vmem:[%s5 + $0x2c] sm:$0xf]
    %v111 = vld [vmem:[%s5 + $0x30] sm:$0xf]
    %v112 = vld [vmem:[%s5 + $0x34] sm:$0xf]
    %v113 = vld [vmem:[%s5 + $0x38] sm:$0xf]
    %v114 = vld [vmem:[%s5 + $0x3c] sm:$0xf]
    %v115 = vld [vmem:[%s6] sm:$0x1]
    %v118 = vunpack.c.l.b16 %v81
    %v119 = vunpack.c.l.b16 %v82
    %v120 = vpack.c.b16 %v119, %v118
    %v138 = vunpack.c.l.b16 %v83
    %v139 = vunpack.c.l.b16 %v84
    %v140 = vunpack.c.l.b16 %v85
    %v141 = vunpack.c.l.b16 %v86
    %v142 = vunpack.c.l.b16 %v87
    %v143 = vunpack.c.l.b16 %v88
    %v144 = vunpack.c.l.b16 %v89
    %v145 = vunpack.c.l.b16 %v90
    %v146 = vunpack.c.l.b16 %v91
    %v147 = vunpack.c.l.b16 %v92
    %v148 = vunpack.c.l.b16 %v93
    %v149 = vunpack.c.l.b16 %v94
    %v150 = vunpack.c.l.b16 %v95
    %v151 = vunpack.c.l.b16 %v96
    %v152 = vunpack.c.l.b16 %v97
    %v153 = vunpack.c.l.b16 %v98
    %v154 = vpack.c.b16 %v139, %v138
    %v155 = vpack.c.b16 %v141, %v140
    %v156 = vpack.c.b16 %v143, %v142
    %v157 = vpack.c.b16 %v145, %v144
    %v158 = vpack.c.b16 %v147, %v146
    %v159 = vpack.c.b16 %v149, %v148
    %v160 = vpack.c.b16 %v151, %v150
    %v161 = vpack.c.b16 %v153, %v152
    %170 = vmatprep.subr.bf16.mxu0 0
    %171 = vmatpush1.bf16.msra.mxu0 %v154
    %172 = vmatprep.subr.bf16.mxu0 0
    %173 = vmatpush1.bf16.msra.mxu0 %v155
    %174 = vmatprep.subr.bf16.mxu0 0
    %175 = vmatpush1.bf16.msra.mxu0 %v156
    %176 = vmatprep.subr.bf16.mxu0 0
    %177 = vmatpush1.bf16.msra.mxu0 %v157
    %178 = vmatprep.subr.bf16.mxu0 0
    %179 = vmatpush1.bf16.msra.mxu0 %v158
    %180 = vmatprep.subr.bf16.mxu0 0
    %181 = vmatpush1.bf16.msra.mxu0 %v159
    %182 = vmatprep.subr.bf16.mxu0 0
    %183 = vmatpush1.bf16.msra.mxu0 %v160
    %184 = vmatprep.subr.bf16.mxu0 0
    %185 = vmatpush1.bf16.msra.mxu0 %v161
    %186 = vmatprep.subr.bf16.mxu0 0
    %187 = vmatpush1.bf16.msra.mxu0 0
    %188 = vmatprep.subr.bf16.mxu0 0
    %189 = vmatpush1.bf16.msra.mxu0 0
    %190 = vmatprep.subr.bf16.mxu0 0
    %191 = vmatpush1.bf16.msra.mxu0 0
    %192 = vmatprep.subr.bf16.mxu0 0
    %193 = vmatpush1.bf16.msra.mxu0 0
    %194 = vmatprep.subr.bf16.mxu0 0
    %195 = vmatpush1.bf16.msra.mxu0 0
    %196 = vmatprep.subr.bf16.mxu0 0
    %197 = vmatpush1.bf16.msra.mxu0 0
    %198 = vmatprep.subr.bf16.mxu0 0
    %199 = vmatpush1.bf16.msra.mxu0 0
    %200 = vmatprep.subr.bf16.mxu0 0
    %201 = vmatpush1.bf16.msra.mxu0 0
    %202 = vmatprep.mubr.bf16.mxu0 0
    %203 = vmatmul.mubr.bf16.gmra.mrb[0].mxu0 %v120
    %v204 = vpop.f32.mrb[0].mxu0
    %v205 = vadd.f32 0.0, %v204
    %v206 = vpop.f32.mrb[0].mxu0
    %v207 = vpop.f32.mrb[0].mxu0
    %v208 = vadd.f32 0.0, %v207
    %v209 = vpop.f32.mrb[0].mxu0
    %210 = vdwg.mxu0
    %v211 = vrot.slane %v205, 4
    %v212 = vadd.f32 %v205, %v211
    %v213 = vrot.slane %v212, 2
    %v214 = vadd.f32 %v212, %v213
    %v215 = vrot.slane %v214, 1
    %v216 = vadd.f32 %v214, %v215
    %v217 = vrot.slane %v208, 4
    %v218 = vadd.f32 %v208, %v217
    %v219 = vrot.slane %v218, 2
    %v220 = vadd.f32 %v218, %v219
    %v221 = vrot.slane %v220, 1
    %v222 = vadd.f32 %v220, %v221
    %v223 = vrcp.pop 8.0
    %v224 = vmul.f32 %v216, %v223
    %v225 = vmul.f32 %v222, %v223
    %v226 = vpack.c.bf16 %v224, %v224
    %v227 = vpack.c.bf16 %v225, %v225
    %v229 = vlaneseq
    %v230 = vshrl.u32 %v229, 7
    %v231 = vsub.s32 0, %v230
    %v232 = vrot.slane %v115, %v231
    %v236 = vunpack.c.l.b16 %v226
    %v237 = vunpack.c.l.b16 %v227
    %vm238 = vcmask 1041409
    %v239 = vsel %vm238, %v237, %v236
    %v240 = vpack.c.b16 %v239, %v239
    %v258 = vunpack.c.l.b16 %v99
    %v259 = vunpack.c.l.b16 %v100
    %v260 = vunpack.c.l.b16 %v101
    %v261 = vunpack.c.l.b16 %v102
    %v262 = vunpack.c.l.b16 %v103
    %v263 = vunpack.c.l.b16 %v104
    %v264 = vunpack.c.l.b16 %v105
    %v265 = vunpack.c.l.b16 %v106
    %v266 = vunpack.c.l.b16 %v107
    %v267 = vunpack.c.l.b16 %v108
    %v268 = vunpack.c.l.b16 %v109
    %v269 = vunpack.c.l.b16 %v110
    %v270 = vunpack.c.l.b16 %v111
    %v271 = vunpack.c.l.b16 %v112
    %v272 = vunpack.c.l.b16 %v113
    %v273 = vunpack.c.l.b16 %v114
    %v274 = vpack.c.b16 %v259, %v258
    %v275 = vpack.c.b16 %v261, %v260
    %v276 = vpack.c.b16 %v263, %v262
    %v277 = vpack.c.b16 %v265, %v264
    %v278 = vpack.c.b16 %v267, %v266
    %v279 = vpack.c.b16 %v269, %v268
    %v280 = vpack.c.b16 %v271, %v270
    %v281 = vpack.c.b16 %v273, %v272
    %290 = vmatprep.subr.bf16.mxu0 0
    %291 = vmatpush1.bf16.msra.mxu0 %v274
    %292 = vmatprep.subr.bf16.mxu0 0
    %293 = vmatpush1.bf16.msra.mxu0 %v275
    %294 = vmatprep.subr.bf16.mxu0 0
    %295 = vmatpush1.bf16.msra.mxu0 %v276
    %296 = vmatprep.subr.bf16.mxu0 0
    %297 = vmatpush1.bf16.msra.mxu0 %v277
    %298 = vmatprep.subr.bf16.mxu0 0
    %299 = vmatpush1.bf16.msra.mxu0 %v278
    %300 = vmatprep.subr.bf16.mxu0 0
    %301 = vmatpush1.bf16.msra.mxu0 %v279
    %302 = vmatprep.subr.bf16.mxu0 0
    %303 = vmatpush1.bf16.msra.mxu0 %v280
    %304 = vmatprep.subr.bf16.mxu0 0
    %305 = vmatpush1.bf16.msra.mxu0 %v281
    %306 = vmatprep.subr.bf16.mxu0 0
    %307 = vmatpush1.bf16.msra.mxu0 0
    %308 = vmatprep.subr.bf16.mxu0 0
    %309 = vmatpush1.bf16.msra.mxu0 0
    %310 = vmatprep.subr.bf16.mxu0 0
    %311 = vmatpush1.bf16.msra.mxu0 0
    %312 = vmatprep.subr.bf16.mxu0 0
    %313 = vmatpush1.bf16.msra.mxu0 0
    %314 = vmatprep.subr.bf16.mxu0 0
    %315 = vmatpush1.bf16.msra.mxu0 0
    %316 = vmatprep.subr.bf16.mxu0 0
    %317 = vmatpush1.bf16.msra.mxu0 0
    %318 = vmatprep.subr.bf16.mxu0 0
    %319 = vmatpush1.bf16.msra.mxu0 0
    %320 = vmatprep.subr.bf16.mxu0 0
    %321 = vmatpush1.bf16.msra.mxu0 0
    %322 = vmatprep.mubr.bf16.mxu0 0
    %323 = vmatmul.mubr.bf16.gmra.mrb[0].mxu0 %v240
    %v324 = vpop.f32.mrb[0].mxu0
    %v325 = vadd.f32 %v232, %v324
    %v326 = vpop.f32.mrb[0].mxu0
    %v327 = vpop.f32.mrb[0].mxu0
    %v328 = vpop.f32.mrb[0].mxu0
    %329 = vdwg.mxu0
    %v330 = vld [vmem:[%s1] sm:$0xf]
    %v331 = vld [vmem:[%s1 + $0x4] sm:$0xf]
    %v332 = vld [vmem:[%s1 + $0x8] sm:$0xf]
    %v333 = vld [vmem:[%s1 + $0xc] sm:$0xf]
    %v334 = vpack.c.bf16 %v325, %v325
    %v335 = vld [vmem:[%s7] sm:$0xf]
    %v336 = vld [vmem:[%s7 + $0x4] sm:$0xf]
    %v337 = vld [vmem:[%s7 + $0x8] sm:$0xf]
    %v338 = vld [vmem:[%s7 + $0xc] sm:$0xf]
    %v339 = vld [vmem:[%s7 + $0x10] sm:$0xf]
    %v340 = vld [vmem:[%s7 + $0x14] sm:$0xf]
    %v341 = vld [vmem:[%s7 + $0x18] sm:$0xf]
    %v342 = vld [vmem:[%s7 + $0x1c] sm:$0xf]
    %v343 = vld [vmem:[%s7 + $0x20] sm:$0xf]
    %v344 = vld [vmem:[%s7 + $0x24] sm:$0xf]
    %v345 = vld [vmem:[%s7 + $0x28] sm:$0xf]
    %v346 = vld [vmem:[%s7 + $0x2c] sm:$0xf]
    %v347 = vld [vmem:[%s7 + $0x30] sm:$0xf]
    %v348 = vld [vmem:[%s7 + $0x34] sm:$0xf]
    %v349 = vld [vmem:[%s7 + $0x38] sm:$0xf]
    %v350 = vld [vmem:[%s7 + $0x3c] sm:$0xf]
    %v351 = vld [vmem:[%s8] sm:$0x1]
    %v352 = vld [vmem:[%s9] sm:$0xf]
    %v353 = vld [vmem:[%s9 + $0x4] sm:$0xf]
    %v354 = vld [vmem:[%s9 + $0x8] sm:$0xf]
    %v355 = vld [vmem:[%s9 + $0xc] sm:$0xf]
    %v356 = vld [vmem:[%s9 + $0x10] sm:$0xf]
    %v357 = vld [vmem:[%s9 + $0x14] sm:$0xf]
    %v358 = vld [vmem:[%s9 + $0x18] sm:$0xf]
    %v359 = vld [vmem:[%s9 + $0x1c] sm:$0xf]
    %v360 = vld [vmem:[%s9 + $0x20] sm:$0xf]
    %v361 = vld [vmem:[%s9 + $0x24] sm:$0xf]
    %v362 = vld [vmem:[%s9 + $0x28] sm:$0xf]
    %v363 = vld [vmem:[%s9 + $0x2c] sm:$0xf]
    %v364 = vld [vmem:[%s9 + $0x30] sm:$0xf]
    %v365 = vld [vmem:[%s9 + $0x34] sm:$0xf]
    %v366 = vld [vmem:[%s9 + $0x38] sm:$0xf]
    %v367 = vld [vmem:[%s9 + $0x3c] sm:$0xf]
    %v368 = vld [vmem:[%s9 + $0x40] sm:$0xf]
    %v369 = vld [vmem:[%s9 + $0x44] sm:$0xf]
    %v370 = vld [vmem:[%s9 + $0x48] sm:$0xf]
    %v371 = vld [vmem:[%s9 + $0x4c] sm:$0xf]
    %v372 = vld [vmem:[%s9 + $0x50] sm:$0xf]
    %v373 = vld [vmem:[%s9 + $0x54] sm:$0xf]
    %v374 = vld [vmem:[%s9 + $0x58] sm:$0xf]
    %v375 = vld [vmem:[%s9 + $0x5c] sm:$0xf]
    %v376 = vld [vmem:[%s9 + $0x60] sm:$0xf]
    %v377 = vld [vmem:[%s9 + $0x64] sm:$0xf]
    %v378 = vld [vmem:[%s9 + $0x68] sm:$0xf]
    %v379 = vld [vmem:[%s9 + $0x6c] sm:$0xf]
    %v380 = vld [vmem:[%s9 + $0x70] sm:$0xf]
    %v381 = vld [vmem:[%s9 + $0x74] sm:$0xf]
    %v382 = vld [vmem:[%s9 + $0x78] sm:$0xf]
    %v383 = vld [vmem:[%s9 + $0x7c] sm:$0xf]
    %v384 = vld [vmem:[%s10] sm:$0x1]
    %v386 = vlaneseq
    %v387 = vshrl.u32 %v386, 7
    %v388 = vsub.s32 0, %v387
    %v389 = vrot.slane %v351, %v388
    %v395 = vunpack.c.l.b16 %v330
    %v396 = vunpack.c.l.b16 %v331
    %v397 = vunpack.c.l.b16 %v332
    %v398 = vunpack.c.l.b16 %v333
    %v399 = vpack.c.b16 %v396, %v395
    %v400 = vpack.c.b16 %v398, %v397
    %v419 = vunpack.c.l.b16 %v335
    %v420 = vunpack.c.l.b16 %v336
    %v421 = vunpack.c.l.b16 %v337
    %v422 = vunpack.c.l.b16 %v338
    %v423 = vunpack.c.l.b16 %v339
    %v424 = vunpack.c.l.b16 %v340
    %v425 = vunpack.c.l.b16 %v341
    %v426 = vunpack.c.l.b16 %v342
    %v427 = vunpack.c.l.b16 %v343
    %v428 = vunpack.c.l.b16 %v344
    %v429 = vunpack.c.l.b16 %v345
    %v430 = vunpack.c.l.b16 %v346
    %v431 = vunpack.c.l.b16 %v347
    %v432 = vunpack.c.l.b16 %v348
    %v433 = vunpack.c.l.b16 %v349
    %v434 = vunpack.c.l.b16 %v350
    %v435 = vpack.c.b16 %v420, %v419
    %v436 = vpack.c.b16 %v422, %v421
    %v437 = vpack.c.b16 %v424, %v423
    %v438 = vpack.c.b16 %v426, %v425
    %v439 = vpack.c.b16 %v428, %v427
    %v440 = vpack.c.b16 %v430, %v429
    %v441 = vpack.c.b16 %v432, %v431
    %v442 = vpack.c.b16 %v434, %v433
    %451 = vmatprep.subr.bf16.mxu0 0
    %452 = vmatpush1.bf16.msra.mxu0 %v435
    %453 = vmatprep.subr.bf16.mxu0 0
    %454 = vmatpush1.bf16.msra.mxu0 %v436
    %455 = vmatprep.subr.bf16.mxu0 0
    %456 = vmatpush1.bf16.msra.mxu0 %v437
    %457 = vmatprep.subr.bf16.mxu0 0
    %458 = vmatpush1.bf16.msra.mxu0 %v438
    %459 = vmatprep.subr.bf16.mxu0 0
    %460 = vmatpush1.bf16.msra.mxu0 %v439
    %461 = vmatprep.subr.bf16.mxu0 0
    %462 = vmatpush1.bf16.msra.mxu0 %v440
    %463 = vmatprep.subr.bf16.mxu0 0
    %464 = vmatpush1.bf16.msra.mxu0 %v441
    %465 = vmatprep.subr.bf16.mxu0 0
    %466 = vmatpush1.bf16.msra.mxu0 %v442
    %467 = vmatprep.subr.bf16.mxu0 0
    %468 = vmatpush1.bf16.msra.mxu0 0
    %469 = vmatprep.subr.bf16.mxu0 0
    %470 = vmatpush1.bf16.msra.mxu0 0
    %471 = vmatprep.subr.bf16.mxu0 0
    %472 = vmatpush1.bf16.msra.mxu0 0
    %473 = vmatprep.subr.bf16.mxu0 0
    %474 = vmatpush1.bf16.msra.mxu0 0
    %475 = vmatprep.subr.bf16.mxu0 0
    %476 = vmatpush1.bf16.msra.mxu0 0
    %477 = vmatprep.subr.bf16.mxu0 0
    %478 = vmatpush1.bf16.msra.mxu0 0
    %479 = vmatprep.subr.bf16.mxu0 0
    %480 = vmatpush1.bf16.msra.mxu0 0
    %481 = vmatprep.subr.bf16.mxu0 0
    %482 = vmatpush1.bf16.msra.mxu0 0
    %483 = vmatprep.mubr.bf16.mxu0 0
    %484 = vmatmul.mubr.bf16.gmra.mrb[0].mxu0 %v399
    %v485 = vpop.f32.mrb[0].mxu0
    %v486 = vadd.f32 %v389, %v485
    %v487 = vpop.f32.mrb[0].mxu0
    %v488 = vpop.f32.mrb[0].mxu0
    %v489 = vadd.f32 %v389, %v488
    %v490 = vpop.f32.mrb[0].mxu0
    %491 = vmatprep.mubr.bf16.mxu0 0
    %492 = vmatmul.mubr.bf16.gmra.mrb[0].mxu0 %v400
    %v493 = vpop.f32.mrb[0].mxu0
    %v494 = vadd.f32 %v389, %v493
    %v495 = vpop.f32.mrb[0].mxu0
    %v496 = vpop.f32.mrb[0].mxu0
    %v497 = vadd.f32 %v389, %v496
    %v498 = vpop.f32.mrb[0].mxu0
    %499 = vdwg.mxu0
    %v500 = vmax.f32 %v486, 0.0
    %v501 = vmax.f32 %v489, 0.0
    %v502 = vmax.f32 %v494, 0.0
    %v503 = vmax.f32 %v497, 0.0
    %v504 = vadd.f32 %v500, %v501
    %v505 = vrot.slane %v504, 4
    %v506 = vadd.f32 %v504, %v505
    %v507 = vrot.slane %v506, 2
    %v508 = vadd.f32 %v506, %v507
    %v509 = vrot.slane %v508, 1
    %v510 = vadd.f32 %v508, %v509
    %v511 = vadd.f32 %v502, %v503
    %v512 = vrot.slane %v511, 4
    %v513 = vadd.f32 %v511, %v512
    %v514 = vrot.slane %v513, 2
    %v515 = vadd.f32 %v513, %v514
    %v516 = vrot.slane %v515, 1
    %v517 = vadd.f32 %v515, %v516
    %v518 = vrcp.pop 16.0
    %v519 = vmul.f32 %v510, %v518
    %v520 = vmul.f32 %v517, %v518
    %v521 = vpack.c.bf16 %v519, %v519
    %v522 = vpack.c.bf16 %v520, %v520
    %v525 = vunpack.c.l.b16 %v521
    %v526 = vunpack.c.l.b16 %v522
    %v527 = vsel %vm238, %v526, %v525
    %v528 = vpack.c.b16 %v527, %v527
    %v531 = vlaneseq
    %v532 = vshrl.u32 %v531, 7
    %v533 = vsub.s32 0, %v532
    %v534 = vrot.slane %v384, %v533
    %v568 = vunpack.c.l.b16 %v352
    %v569 = vunpack.c.l.b16 %v353
    %v570 = vunpack.c.l.b16 %v354
    %v571 = vunpack.c.l.b16 %v355
    %v572 = vunpack.c.l.b16 %v356
    %v573 = vunpack.c.l.b16 %v357
    %v574 = vunpack.c.l.b16 %v358
    %v575 = vunpack.c.l.b16 %v359
    %v576 = vunpack.c.l.b16 %v360
    %v577 = vunpack.c.l.b16 %v361
    %v578 = vunpack.c.l.b16 %v362
    %v579 = vunpack.c.l.b16 %v363
    %v580 = vunpack.c.l.b16 %v364
    %v581 = vunpack.c.l.b16 %v365
    %v582 = vunpack.c.l.b16 %v366
    %v583 = vunpack.c.l.b16 %v367
    %v584 = vunpack.c.l.b16 %v368
    %v585 = vunpack.c.l.b16 %v369
    %v586 = vunpack.c.l.b16 %v370
    %v587 = vunpack.c.l.b16 %v371
    %v588 = vunpack.c.l.b16 %v372
    %v589 = vunpack.c.l.b16 %v373
    %v590 = vunpack.c.l.b16 %v374
    %v591 = vunpack.c.l.b16 %v375
    %v592 = vunpack.c.l.b16 %v376
    %v593 = vunpack.c.l.b16 %v377
    %v594 = vunpack.c.l.b16 %v378
    %v595 = vunpack.c.l.b16 %v379
    %v596 = vunpack.c.l.b16 %v380
    %v597 = vunpack.c.l.b16 %v381
    %v598 = vunpack.c.l.b16 %v382
    %v599 = vunpack.c.l.b16 %v383
    %v600 = vpack.c.b16 %v569, %v568
    %v601 = vpack.c.b16 %v571, %v570
    %v602 = vpack.c.b16 %v573, %v572
    %v603 = vpack.c.b16 %v575, %v574
    %v604 = vpack.c.b16 %v577, %v576
    %v605 = vpack.c.b16 %v579, %v578
    %v606 = vpack.c.b16 %v581, %v580
    %v607 = vpack.c.b16 %v583, %v582
    %v608 = vpack.c.b16 %v585, %v584
    %v609 = vpack.c.b16 %v587, %v586
    %v610 = vpack.c.b16 %v589, %v588
    %v611 = vpack.c.b16 %v591, %v590
    %v612 = vpack.c.b16 %v593, %v592
    %v613 = vpack.c.b16 %v595, %v594
    %v614 = vpack.c.b16 %v597, %v596
    %v615 = vpack.c.b16 %v599, %v598
    %632 = vmatprep.subr.bf16.mxu0 0
    %633 = vmatpush1.bf16.msra.mxu0 %v600
    %634 = vmatprep.subr.bf16.mxu0 0
    %635 = vmatpush1.bf16.msra.mxu0 %v601
    %636 = vmatprep.subr.bf16.mxu0 0
    %637 = vmatpush1.bf16.msra.mxu0 %v602
    %638 = vmatprep.subr.bf16.mxu0 0
    %639 = vmatpush1.bf16.msra.mxu0 %v603
    %640 = vmatprep.subr.bf16.mxu0 0
    %641 = vmatpush1.bf16.msra.mxu0 %v604
    %642 = vmatprep.subr.bf16.mxu0 0
    %643 = vmatpush1.bf16.msra.mxu0 %v605
    %644 = vmatprep.subr.bf16.mxu0 0
    %645 = vmatpush1.bf16.msra.mxu0 %v606
    %646 = vmatprep.subr.bf16.mxu0 0
    %647 = vmatpush1.bf16.msra.mxu0 %v607
    %648 = vmatprep.subr.bf16.mxu0 0
    %649 = vmatpush1.bf16.msra.mxu0 %v608
    %650 = vmatprep.subr.bf16.mxu0 0
    %651 = vmatpush1.bf16.msra.mxu0 %v609
    %652 = vmatprep.subr.bf16.mxu0 0
    %653 = vmatpush1.bf16.msra.mxu0 %v610
    %654 = vmatprep.subr.bf16.mxu0 0
    %655 = vmatpush1.bf16.msra.mxu0 %v611
    %656 = vmatprep.subr.bf16.mxu0 0
    %657 = vmatpush1.bf16.msra.mxu0 %v612
    %658 = vmatprep.subr.bf16.mxu0 0
    %659 = vmatpush1.bf16.msra.mxu0 %v613
    %660 = vmatprep.subr.bf16.mxu0 0
    %661 = vmatpush1.bf16.msra.mxu0 %v614
    %662 = vmatprep.subr.bf16.mxu0 0
    %663 = vmatpush1.bf16.msra.mxu0 %v615
    %664 = vmatprep.mubr.bf16.mxu0 %v334
    %665 = vmatmul.mubr.bf16.gmra.mrb[0].mxu0 %v528
    %v666 = vpop.f32.mrb[0].mxu0
    %v667 = vadd.f32 %v534, %v666
    %v668 = vpop.f32.mrb[0].mxu0
    %v669 = vpop.f32.mrb[0].mxu0
    %v670 = vpop.f32.mrb[0].mxu0
    %671 = vdwg.mxu0
    %v672 = vpack.c.bf16 %v667, %v667
    %v673 = vld [vmem:[%s2] sm:$0x1]
    %v674 = vld [vmem:[%s3] sm:$0x1]
    %v675 = vld [vmem:[%s11] sm:$0xf]
    %v676 = vld [vmem:[%s11 + $0x4] sm:$0xf]
    %v677 = vld [vmem:[%s11 + $0x8] sm:$0xf]
    %v678 = vld [vmem:[%s11 + $0xc] sm:$0xf]
    %v679 = vld [vmem:[%s11 + $0x10] sm:$0xf]
    %v680 = vld [vmem:[%s11 + $0x14] sm:$0xf]
    %v681 = vld [vmem:[%s11 + $0x18] sm:$0xf]
    %v682 = vld [vmem:[%s11 + $0x1c] sm:$0xf]
    %v683 = vld [vmem:[%s11 + $0x20] sm:$0xf]
    %v684 = vld [vmem:[%s11 + $0x24] sm:$0xf]
    %v685 = vld [vmem:[%s11 + $0x28] sm:$0xf]
    %v686 = vld [vmem:[%s11 + $0x2c] sm:$0xf]
    %v687 = vld [vmem:[%s11 + $0x30] sm:$0xf]
    %v688 = vld [vmem:[%s11 + $0x34] sm:$0xf]
    %v689 = vld [vmem:[%s11 + $0x38] sm:$0xf]
    %v690 = vld [vmem:[%s11 + $0x3c] sm:$0xf]
    %v691 = vld [vmem:[%s11 + $0x40] sm:$0xf]
    %v692 = vld [vmem:[%s11 + $0x44] sm:$0xf]
    %v693 = vld [vmem:[%s11 + $0x48] sm:$0xf]
    %v694 = vld [vmem:[%s11 + $0x4c] sm:$0xf]
    %v695 = vld [vmem:[%s11 + $0x50] sm:$0xf]
    %v696 = vld [vmem:[%s11 + $0x54] sm:$0xf]
    %v697 = vld [vmem:[%s11 + $0x58] sm:$0xf]
    %v698 = vld [vmem:[%s11 + $0x5c] sm:$0xf]
    %v699 = vld [vmem:[%s11 + $0x60] sm:$0xf]
    %v700 = vld [vmem:[%s11 + $0x64] sm:$0xf]
    %v701 = vld [vmem:[%s11 + $0x68] sm:$0xf]
    %v702 = vld [vmem:[%s11 + $0x6c] sm:$0xf]
    %v703 = vld [vmem:[%s11 + $0x70] sm:$0xf]
    %v704 = vld [vmem:[%s11 + $0x74] sm:$0xf]
    %v705 = vld [vmem:[%s11 + $0x78] sm:$0xf]
    %v706 = vld [vmem:[%s11 + $0x7c] sm:$0xf]
    %v707 = vld [vmem:[%s12] sm:$0x1]
    %v708 = vld [vmem:[%s13] sm:$0xf]
    %v709 = vld [vmem:[%s13 + $0x4] sm:$0xf]
    %v710 = vld [vmem:[%s13 + $0x8] sm:$0xf]
    %v711 = vld [vmem:[%s13 + $0xc] sm:$0xf]
    %v712 = vld [vmem:[%s13 + $0x10] sm:$0xf]
    %v713 = vld [vmem:[%s13 + $0x14] sm:$0xf]
    %v714 = vld [vmem:[%s13 + $0x18] sm:$0xf]
    %v715 = vld [vmem:[%s13 + $0x1c] sm:$0xf]
    %v716 = vld [vmem:[%s13 + $0x20] sm:$0xf]
    %v717 = vld [vmem:[%s13 + $0x24] sm:$0xf]
    %v718 = vld [vmem:[%s13 + $0x28] sm:$0xf]
    %v719 = vld [vmem:[%s13 + $0x2c] sm:$0xf]
    %v720 = vld [vmem:[%s13 + $0x30] sm:$0xf]
    %v721 = vld [vmem:[%s13 + $0x34] sm:$0xf]
    %v722 = vld [vmem:[%s13 + $0x38] sm:$0xf]
    %v723 = vld [vmem:[%s13 + $0x3c] sm:$0xf]
    %v724 = vld [vmem:[%s13 + $0x40] sm:$0xf]
    %v725 = vld [vmem:[%s13 + $0x44] sm:$0xf]
    %v726 = vld [vmem:[%s13 + $0x48] sm:$0xf]
    %v727 = vld [vmem:[%s13 + $0x4c] sm:$0xf]
    %v728 = vld [vmem:[%s13 + $0x50] sm:$0xf]
    %v729 = vld [vmem:[%s13 + $0x54] sm:$0xf]
    %v730 = vld [vmem:[%s13 + $0x58] sm:$0xf]
    %v731 = vld [vmem:[%s13 + $0x5c] sm:$0xf]
    %v732 = vld [vmem:[%s13 + $0x60] sm:$0xf]
    %v733 = vld [vmem:[%s13 + $0x64] sm:$0xf]
    %v734 = vld [vmem:[%s13 + $0x68] sm:$0xf]
    %v735 = vld [vmem:[%s13 + $0x6c] sm:$0xf]
    %v736 = vld [vmem:[%s13 + $0x70] sm:$0xf]
    %v737 = vld [vmem:[%s13 + $0x74] sm:$0xf]
    %v738 = vld [vmem:[%s13 + $0x78] sm:$0xf]
    %v739 = vld [vmem:[%s13 + $0x7c] sm:$0xf]
    %v740 = vld [vmem:[%s14] sm:$0x1]
    %v741 = vld [vmem:[%s15] sm:$0xf]
    %v742 = vld [vmem:[%s15 + $0x4] sm:$0xf]
    %v743 = vld [vmem:[%s15 + $0x8] sm:$0xf]
    %v744 = vld [vmem:[%s15 + $0xc] sm:$0xf]
    %v745 = vld [vmem:[%s15 + $0x10] sm:$0xf]
    %v746 = vld [vmem:[%s15 + $0x14] sm:$0xf]
    %v747 = vld [vmem:[%s15 + $0x18] sm:$0xf]
    %v748 = vld [vmem:[%s15 + $0x1c] sm:$0xf]
    %v749 = vld [vmem:[%s15 + $0x20] sm:$0xf]
    %v750 = vld [vmem:[%s15 + $0x24] sm:$0xf]
    %v751 = vld [vmem:[%s15 + $0x28] sm:$0xf]
    %v752 = vld [vmem:[%s15 + $0x2c] sm:$0xf]
    %v753 = vld [vmem:[%s15 + $0x30] sm:$0xf]
    %v754 = vld [vmem:[%s15 + $0x34] sm:$0xf]
    %v755 = vld [vmem:[%s15 + $0x38] sm:$0xf]
    %v756 = vld [vmem:[%s15 + $0x3c] sm:$0xf]
    %v757 = vld [vmem:[%s16] sm:$0x1]
    %v759 = vlaneseq
    %v760 = vshrl.u32 %v759, 7
    %v761 = vsub.s32 0, %v760
    %v762 = vrot.slane %v707, %v761
    %v796 = vunpack.c.l.b16 %v675
    %v797 = vunpack.c.l.b16 %v676
    %v798 = vunpack.c.l.b16 %v677
    %v799 = vunpack.c.l.b16 %v678
    %v800 = vunpack.c.l.b16 %v679
    %v801 = vunpack.c.l.b16 %v680
    %v802 = vunpack.c.l.b16 %v681
    %v803 = vunpack.c.l.b16 %v682
    %v804 = vunpack.c.l.b16 %v683
    %v805 = vunpack.c.l.b16 %v684
    %v806 = vunpack.c.l.b16 %v685
    %v807 = vunpack.c.l.b16 %v686
    %v808 = vunpack.c.l.b16 %v687
    %v809 = vunpack.c.l.b16 %v688
    %v810 = vunpack.c.l.b16 %v689
    %v811 = vunpack.c.l.b16 %v690
    %v812 = vunpack.c.l.b16 %v691
    %v813 = vunpack.c.l.b16 %v692
    %v814 = vunpack.c.l.b16 %v693
    %v815 = vunpack.c.l.b16 %v694
    %v816 = vunpack.c.l.b16 %v695
    %v817 = vunpack.c.l.b16 %v696
    %v818 = vunpack.c.l.b16 %v697
    %v819 = vunpack.c.l.b16 %v698
    %v820 = vunpack.c.l.b16 %v699
    %v821 = vunpack.c.l.b16 %v700
    %v822 = vunpack.c.l.b16 %v701
    %v823 = vunpack.c.l.b16 %v702
    %v824 = vunpack.c.l.b16 %v703
    %v825 = vunpack.c.l.b16 %v704
    %v826 = vunpack.c.l.b16 %v705
    %v827 = vunpack.c.l.b16 %v706
    %v828 = vpack.c.b16 %v797, %v796
    %v829 = vpack.c.b16 %v799, %v798
    %v830 = vpack.c.b16 %v801, %v800
    %v831 = vpack.c.b16 %v803, %v802
    %v832 = vpack.c.b16 %v805, %v804
    %v833 = vpack.c.b16 %v807, %v806
    %v834 = vpack.c.b16 %v809, %v808
    %v835 = vpack.c.b16 %v811, %v810
    %v836 = vpack.c.b16 %v813, %v812
    %v837 = vpack.c.b16 %v815, %v814
    %v838 = vpack.c.b16 %v817, %v816
    %v839 = vpack.c.b16 %v819, %v818
    %v840 = vpack.c.b16 %v821, %v820
    %v841 = vpack.c.b16 %v823, %v822
    %v842 = vpack.c.b16 %v825, %v824
    %v843 = vpack.c.b16 %v827, %v826
    %860 = vmatprep.subr.bf16.mxu0 0
    %861 = vmatpush1.bf16.msra.mxu0 %v828
    %862 = vmatprep.subr.bf16.mxu0 0
    %863 = vmatpush1.bf16.msra.mxu0 %v829
    %864 = vmatprep.subr.bf16.mxu0 0
    %865 = vmatpush1.bf16.msra.mxu0 %v830
    %866 = vmatprep.subr.bf16.mxu0 0
    %867 = vmatpush1.bf16.msra.mxu0 %v831
    %868 = vmatprep.subr.bf16.mxu0 0
    %869 = vmatpush1.bf16.msra.mxu0 %v832
    %870 = vmatprep.subr.bf16.mxu0 0
    %871 = vmatpush1.bf16.msra.mxu0 %v833
    %872 = vmatprep.subr.bf16.mxu0 0
    %873 = vmatpush1.bf16.msra.mxu0 %v834
    %874 = vmatprep.subr.bf16.mxu0 0
    %875 = vmatpush1.bf16.msra.mxu0 %v835
    %876 = vmatprep.subr.bf16.mxu0 0
    %877 = vmatpush1.bf16.msra.mxu0 %v836
    %878 = vmatprep.subr.bf16.mxu0 0
    %879 = vmatpush1.bf16.msra.mxu0 %v837
    %880 = vmatprep.subr.bf16.mxu0 0
    %881 = vmatpush1.bf16.msra.mxu0 %v838
    %882 = vmatprep.subr.bf16.mxu0 0
    %883 = vmatpush1.bf16.msra.mxu0 %v839
    %884 = vmatprep.subr.bf16.mxu0 0
    %885 = vmatpush1.bf16.msra.mxu0 %v840
    %886 = vmatprep.subr.bf16.mxu0 0
    %887 = vmatpush1.bf16.msra.mxu0 %v841
    %888 = vmatprep.subr.bf16.mxu0 0
    %889 = vmatpush1.bf16.msra.mxu0 %v842
    %890 = vmatprep.subr.bf16.mxu0 0
    %891 = vmatpush1.bf16.msra.mxu0 %v843
    %892 = vmatprep.mubr.bf16.mxu0 %v672
    %893 = vmatmul.mubr.bf16.gmra.mrb[0].mxu0 %v673
    %v894 = vpop.f32.mrb[0].mxu0
    %v895 = vadd.f32 %v762, %v894
    %v896 = vpop.f32.mrb[0].mxu0
    %v897 = vpop.f32.mrb[0].mxu0
    %v898 = vpop.f32.mrb[0].mxu0
    %899 = vdwg.mxu0
    %v900 = vmax.f32 %v895, 0.0
    %v901 = vpack.c.bf16 %v900, %v900
    %v903 = vlaneseq
    %v904 = vshrl.u32 %v903, 7
    %v905 = vsub.s32 0, %v904
    %v906 = vrot.slane %v740, %v905
    %v940 = vunpack.c.l.b16 %v708
    %v941 = vunpack.c.l.b16 %v709
    %v942 = vunpack.c.l.b16 %v710
    %v943 = vunpack.c.l.b16 %v711
    %v944 = vunpack.c.l.b16 %v712
    %v945 = vunpack.c.l.b16 %v713
    %v946 = vunpack.c.l.b16 %v714
    %v947 = vunpack.c.l.b16 %v715
    %v948 = vunpack.c.l.b16 %v716
    %v949 = vunpack.c.l.b16 %v717
    %v950 = vunpack.c.l.b16 %v718
    %v951 = vunpack.c.l.b16 %v719
    %v952 = vunpack.c.l.b16 %v720
    %v953 = vunpack.c.l.b16 %v721
    %v954 = vunpack.c.l.b16 %v722
    %v955 = vunpack.c.l.b16 %v723
    %v956 = vunpack.c.l.b16 %v724
    %v957 = vunpack.c.l.b16 %v725
    %v958 = vunpack.c.l.b16 %v726
    %v959 = vunpack.c.l.b16 %v727
    %v960 = vunpack.c.l.b16 %v728
    %v961 = vunpack.c.l.b16 %v729
    %v962 = vunpack.c.l.b16 %v730
    %v963 = vunpack.c.l.b16 %v731
    %v964 = vunpack.c.l.b16 %v732
    %v965 = vunpack.c.l.b16 %v733
    %v966 = vunpack.c.l.b16 %v734
    %v967 = vunpack.c.l.b16 %v735
    %v968 = vunpack.c.l.b16 %v736
    %v969 = vunpack.c.l.b16 %v737
    %v970 = vunpack.c.l.b16 %v738
    %v971 = vunpack.c.l.b16 %v739
    %v972 = vpack.c.b16 %v941, %v940
    %v973 = vpack.c.b16 %v943, %v942
    %v974 = vpack.c.b16 %v945, %v944
    %v975 = vpack.c.b16 %v947, %v946
    %v976 = vpack.c.b16 %v949, %v948
    %v977 = vpack.c.b16 %v951, %v950
    %v978 = vpack.c.b16 %v953, %v952
    %v979 = vpack.c.b16 %v955, %v954
    %v980 = vpack.c.b16 %v957, %v956
    %v981 = vpack.c.b16 %v959, %v958
    %v982 = vpack.c.b16 %v961, %v960
    %v983 = vpack.c.b16 %v963, %v962
    %v984 = vpack.c.b16 %v965, %v964
    %v985 = vpack.c.b16 %v967, %v966
    %v986 = vpack.c.b16 %v969, %v968
    %v987 = vpack.c.b16 %v971, %v970
    %1004 = vmatprep.subr.bf16.mxu0 0
    %1005 = vmatpush1.bf16.msra.mxu0 %v972
    %1006 = vmatprep.subr.bf16.mxu0 0
    %1007 = vmatpush1.bf16.msra.mxu0 %v973
    %1008 = vmatprep.subr.bf16.mxu0 0
    %1009 = vmatpush1.bf16.msra.mxu0 %v974
    %1010 = vmatprep.subr.bf16.mxu0 0
    %1011 = vmatpush1.bf16.msra.mxu0 %v975
    %1012 = vmatprep.subr.bf16.mxu0 0
    %1013 = vmatpush1.bf16.msra.mxu0 %v976
    %1014 = vmatprep.subr.bf16.mxu0 0
    %1015 = vmatpush1.bf16.msra.mxu0 %v977
    %1016 = vmatprep.subr.bf16.mxu0 0
    %1017 = vmatpush1.bf16.msra.mxu0 %v978
    %1018 = vmatprep.subr.bf16.mxu0 0
    %1019 = vmatpush1.bf16.msra.mxu0 %v979
    %1020 = vmatprep.subr.bf16.mxu0 0
    %1021 = vmatpush1.bf16.msra.mxu0 %v980
    %1022 = vmatprep.subr.bf16.mxu0 0
    %1023 = vmatpush1.bf16.msra.mxu0 %v981
    %1024 = vmatprep.subr.bf16.mxu0 0
    %1025 = vmatpush1.bf16.msra.mxu0 %v982
    %1026 = vmatprep.subr.bf16.mxu0 0
    %1027 = vmatpush1.bf16.msra.mxu0 %v983
    %1028 = vmatprep.subr.bf16.mxu0 0
    %1029 = vmatpush1.bf16.msra.mxu0 %v984
    %1030 = vmatprep.subr.bf16.mxu0 0
    %1031 = vmatpush1.bf16.msra.mxu0 %v985
    %1032 = vmatprep.subr.bf16.mxu0 0
    %1033 = vmatpush1.bf16.msra.mxu0 %v986
    %1034 = vmatprep.subr.bf16.mxu0 0
    %1035 = vmatpush1.bf16.msra.mxu0 %v987
    %1036 = vmatprep.mubr.bf16.mxu0 %v901
    %1037 = vmatmul.mubr.bf16.gmra.mrb[0].mxu0 %v674
    %v1038 = vpop.f32.mrb[0].mxu0
    %v1039 = vadd.f32 %v906, %v1038
    %v1040 = vpop.f32.mrb[0].mxu0
    %v1041 = vpop.f32.mrb[0].mxu0
    %v1042 = vpop.f32.mrb[0].mxu0
    %1043 = vdwg.mxu0
    %v1044 = vmax.f32 %v1039, 0.0
    %v1045 = vpack.c.bf16 %v1044, %v1044
    %v1047 = vlaneseq
    %v1048 = vshrl.u32 %v1047, 7
    %v1049 = vsub.s32 0, %v1048
    %v1050 = vrot.slane %v757, %v1049
    %v1068 = vunpack.c.l.b16 %v741
    %v1069 = vunpack.c.l.b16 %v742
    %v1070 = vunpack.c.l.b16 %v743
    %v1071 = vunpack.c.l.b16 %v744
    %v1072 = vunpack.c.l.b16 %v745
    %v1073 = vunpack.c.l.b16 %v746
    %v1074 = vunpack.c.l.b16 %v747
    %v1075 = vunpack.c.l.b16 %v748
    %v1076 = vunpack.c.l.b16 %v749
    %v1077 = vunpack.c.l.b16 %v750
    %v1078 = vunpack.c.l.b16 %v751
    %v1079 = vunpack.c.l.b16 %v752
    %v1080 = vunpack.c.l.b16 %v753
    %v1081 = vunpack.c.l.b16 %v754
    %v1082 = vunpack.c.l.b16 %v755
    %v1083 = vunpack.c.l.b16 %v756
    %v1084 = vpack.c.b16 %v1069, %v1068
    %v1085 = vpack.c.b16 %v1071, %v1070
    %v1086 = vpack.c.b16 %v1073, %v1072
    %v1087 = vpack.c.b16 %v1075, %v1074
    %v1088 = vpack.c.b16 %v1077, %v1076
    %v1089 = vpack.c.b16 %v1079, %v1078
    %v1090 = vpack.c.b16 %v1081, %v1080
    %v1091 = vpack.c.b16 %v1083, %v1082
    %1100 = vmatprep.subr.bf16.mxu0 0
    %1101 = vmatpush1.bf16.msra.mxu0 %v1084
    %1102 = vmatprep.subr.bf16.mxu0 0
    %1103 = vmatpush1.bf16.msra.mxu0 %v1085
    %1104 = vmatprep.subr.bf16.mxu0 0
    %1105 = vmatpush1.bf16.msra.mxu0 %v1086
    %1106 = vmatprep.subr.bf16.mxu0 0
    %1107 = vmatpush1.bf16.msra.mxu0 %v1087
    %1108 = vmatprep.subr.bf16.mxu0 0
    %1109 = vmatpush1.bf16.msra.mxu0 %v1088
    %1110 = vmatprep.subr.bf16.mxu0 0
    %1111 = vmatpush1.bf16.msra.mxu0 %v1089
    %1112 = vmatprep.subr.bf16.mxu0 0
    %1113 = vmatpush1.bf16.msra.mxu0 %v1090
    %1114 = vmatprep.subr.bf16.mxu0 0
    %1115 = vmatpush1.bf16.msra.mxu0 %v1091
    %1116 = vmatprep.subr.bf16.mxu0 0
    %1117 = vmatpush1.bf16.msra.mxu0 0
    %1118 = vmatprep.subr.bf16.mxu0 0
    %1119 = vmatpush1.bf16.msra.mxu0 0
    %1120 = vmatprep.subr.bf16.mxu0 0
    %1121 = vmatpush1.bf16.msra.mxu0 0
    %1122 = vmatprep.subr.bf16.mxu0 0
    %1123 = vmatpush1.bf16.msra.mxu0 0
    %1124 = vmatprep.subr.bf16.mxu0 0
    %1125 = vmatpush1.bf16.msra.mxu0 0
    %1126 = vmatprep.subr.bf16.mxu0 0
    %1127 = vmatpush1.bf16.msra.mxu0 0
    %1128 = vmatprep.subr.bf16.mxu0 0
    %1129 = vmatpush1.bf16.msra.mxu0 0
    %1130 = vmatprep.subr.bf16.mxu0 0
    %1131 = vmatpush1.bf16.msra.mxu0 0
    %1132 = vmatprep.mubr.bf16.mxu0 0
    %1133 = vmatmul.mubr.bf16.gmra.mrb[0].mxu0 %v1045
    %v1134 = vpop.f32.mrb[0].mxu0
    %v1135 = vadd.f32 %v1050, %v1134
    %v1136 = vpop.f32.mrb[0].mxu0
    %v1137 = vpop.f32.mrb[0].mxu0
    %v1138 = vpop.f32.mrb[0].mxu0
    %1139 = vdwg.mxu0
    %v1140 = vld [vmem:[%s17] sm:$0xf]
    %v1141 = vld [vmem:[%s17 + $0x4] sm:$0xf]
    %v1142 = vld [vmem:[%s17 + $0x8] sm:$0xf]
    %v1143 = vld [vmem:[%s17 + $0xc] sm:$0xf]
    %v1144 = vld [vmem:[%s17 + $0x10] sm:$0xf]
    %v1145 = vld [vmem:[%s17 + $0x14] sm:$0xf]
    %v1146 = vld [vmem:[%s17 + $0x18] sm:$0xf]
    %v1147 = vld [vmem:[%s17 + $0x1c] sm:$0xf]
    %v1148 = vld [vmem:[%s17 + $0x20] sm:$0xf]
    %v1149 = vld [vmem:[%s17 + $0x24] sm:$0xf]
    %v1150 = vld [vmem:[%s17 + $0x28] sm:$0xf]
    %v1151 = vld [vmem:[%s17 + $0x2c] sm:$0xf]
    %v1152 = vld [vmem:[%s17 + $0x30] sm:$0xf]
    %v1153 = vld [vmem:[%s17 + $0x34] sm:$0xf]
    %v1154 = vld [vmem:[%s17 + $0x38] sm:$0xf]
    %v1155 = vld [vmem:[%s17 + $0x3c] sm:$0xf]
    %v1156 = vld [vmem:[%s18] sm:$0x1]
    %v1157 = vld [vmem:[%s19] sm:$0xf]
    %v1158 = vld [vmem:[%s19 + $0x4] sm:$0xf]
    %v1159 = vld [vmem:[%s19 + $0x8] sm:$0xf]
    %v1160 = vld [vmem:[%s19 + $0xc] sm:$0xf]
    %v1161 = vld [vmem:[%s19 + $0x10] sm:$0xf]
    %v1162 = vld [vmem:[%s19 + $0x14] sm:$0xf]
    %v1163 = vld [vmem:[%s19 + $0x18] sm:$0xf]
    %v1164 = vld [vmem:[%s19 + $0x1c] sm:$0xf]
    %v1165 = vld [vmem:[%s19 + $0x20] sm:$0xf]
    %v1166 = vld [vmem:[%s19 + $0x24] sm:$0xf]
    %v1167 = vld [vmem:[%s19 + $0x28] sm:$0xf]
    %v1168 = vld [vmem:[%s19 + $0x2c] sm:$0xf]
    %v1169 = vld [vmem:[%s19 + $0x30] sm:$0xf]
    %v1170 = vld [vmem:[%s19 + $0x34] sm:$0xf]
    %v1171 = vld [vmem:[%s19 + $0x38] sm:$0xf]
    %v1172 = vld [vmem:[%s19 + $0x3c] sm:$0xf]
    %v1173 = vld [vmem:[%s20] sm:$0x1]
    %v1174 = vld [vmem:[%s21] sm:$0xf]
    %v1175 = vld [vmem:[%s21 + $0x4] sm:$0xf]
    %v1176 = vld [vmem:[%s21 + $0x8] sm:$0xf]
    %v1177 = vld [vmem:[%s21 + $0xc] sm:$0xf]
    %v1178 = vld [vmem:[%s21 + $0x10] sm:$0xf]
    %v1179 = vld [vmem:[%s21 + $0x14] sm:$0xf]
    %v1180 = vld [vmem:[%s21 + $0x18] sm:$0xf]
    %v1181 = vld [vmem:[%s21 + $0x1c] sm:$0xf]
    %v1182 = vld [vmem:[%s21 + $0x20] sm:$0xf]
    %v1183 = vld [vmem:[%s21 + $0x24] sm:$0xf]
    %v1184 = vld [vmem:[%s21 + $0x28] sm:$0xf]
    %v1185 = vld [vmem:[%s21 + $0x2c] sm:$0xf]
    %v1186 = vld [vmem:[%s21 + $0x30] sm:$0xf]
    %v1187 = vld [vmem:[%s21 + $0x34] sm:$0xf]
    %v1188 = vld [vmem:[%s21 + $0x38] sm:$0xf]
    %v1189 = vld [vmem:[%s21 + $0x3c] sm:$0xf]
    %v1190 = vld [vmem:[%s22] sm:$0x1]
    %v1192 = vlaneseq
    %v1193 = vshrl.u32 %v1192, 7
    %v1194 = vsub.s32 0, %v1193
    %v1195 = vrot.slane %v1156, %v1194
    %v1213 = vunpack.c.l.b16 %v1140
    %v1214 = vunpack.c.l.b16 %v1141
    %v1215 = vunpack.c.l.b16 %v1142
    %v1216 = vunpack.c.l.b16 %v1143
    %v1217 = vunpack.c.l.b16 %v1144
    %v1218 = vunpack.c.l.b16 %v1145
    %v1219 = vunpack.c.l.b16 %v1146
    %v1220 = vunpack.c.l.b16 %v1147
    %v1221 = vunpack.c.l.b16 %v1148
    %v1222 = vunpack.c.l.b16 %v1149
    %v1223 = vunpack.c.l.b16 %v1150
    %v1224 = vunpack.c.l.b16 %v1151
    %v1225 = vunpack.c.l.b16 %v1152
    %v1226 = vunpack.c.l.b16 %v1153
    %v1227 = vunpack.c.l.b16 %v1154
    %v1228 = vunpack.c.l.b16 %v1155
    %v1229 = vpack.c.b16 %v1214, %v1213
    %v1230 = vpack.c.b16 %v1216, %v1215
    %v1231 = vpack.c.b16 %v1218, %v1217
    %v1232 = vpack.c.b16 %v1220, %v1219
    %v1233 = vpack.c.b16 %v1222, %v1221
    %v1234 = vpack.c.b16 %v1224, %v1223
    %v1235 = vpack.c.b16 %v1226, %v1225
    %v1236 = vpack.c.b16 %v1228, %v1227
    %1245 = vmatprep.subr.bf16.mxu0 0
    %1246 = vmatpush1.bf16.msra.mxu0 %v1229
    %1247 = vmatprep.subr.bf16.mxu0 0
    %1248 = vmatpush1.bf16.msra.mxu0 %v1230
    %1249 = vmatprep.subr.bf16.mxu0 0
    %1250 = vmatpush1.bf16.msra.mxu0 %v1231
    %1251 = vmatprep.subr.bf16.mxu0 0
    %1252 = vmatpush1.bf16.msra.mxu0 %v1232
    %1253 = vmatprep.subr.bf16.mxu0 0
    %1254 = vmatpush1.bf16.msra.mxu0 %v1233
    %1255 = vmatprep.subr.bf16.mxu0 0
    %1256 = vmatpush1.bf16.msra.mxu0 %v1234
    %1257 = vmatprep.subr.bf16.mxu0 0
    %1258 = vmatpush1.bf16.msra.mxu0 %v1235
    %1259 = vmatprep.subr.bf16.mxu0 0
    %1260 = vmatpush1.bf16.msra.mxu0 %v1236
    %1261 = vmatprep.subr.bf16.mxu0 0
    %1262 = vmatpush1.bf16.msra.mxu0 0
    %1263 = vmatprep.subr.bf16.mxu0 0
    %1264 = vmatpush1.bf16.msra.mxu0 0
    %1265 = vmatprep.subr.bf16.mxu0 0
    %1266 = vmatpush1.bf16.msra.mxu0 0
    %1267 = vmatprep.subr.bf16.mxu0 0
    %1268 = vmatpush1.bf16.msra.mxu0 0
    %1269 = vmatprep.subr.bf16.mxu0 0
    %1270 = vmatpush1.bf16.msra.mxu0 0
    %1271 = vmatprep.subr.bf16.mxu0 0
    %1272 = vmatpush1.bf16.msra.mxu0 0
    %1273 = vmatprep.subr.bf16.mxu0 0
    %1274 = vmatpush1.bf16.msra.mxu0 0
    %1275 = vmatprep.subr.bf16.mxu0 0
    %1276 = vmatpush1.bf16.msra.mxu0 0
    %1277 = vmatprep.mubr.bf16.mxu0 0
    %1278 = vmatmul.mubr.bf16.gmra.mrb[0].mxu0 %v672
    %v1279 = vpop.f32.mrb[0].mxu0
    %v1280 = vadd.f32 %v1195, %v1279
    %v1281 = vpop.f32.mrb[0].mxu0
    %v1282 = vpop.f32.mrb[0].mxu0
    %v1283 = vpop.f32.mrb[0].mxu0
    %1284 = vdwg.mxu0
    %v1285 = vmax.f32 %v1280, 0.0
    %v1286 = vpack.c.bf16 %v1285, %v1285
    %v1288 = vlaneseq
    %v1289 = vshrl.u32 %v1288, 7
    %v1290 = vsub.s32 0, %v1289
    %v1291 = vrot.slane %v1173, %v1290
    %v1309 = vunpack.c.l.b16 %v1157
    %v1310 = vunpack.c.l.b16 %v1158
    %v1311 = vunpack.c.l.b16 %v1159
    %v1312 = vunpack.c.l.b16 %v1160
    %v1313 = vunpack.c.l.b16 %v1161
    %v1314 = vunpack.c.l.b16 %v1162
    %v1315 = vunpack.c.l.b16 %v1163
    %v1316 = vunpack.c.l.b16 %v1164
    %v1317 = vunpack.c.l.b16 %v1165
    %v1318 = vunpack.c.l.b16 %v1166
    %v1319 = vunpack.c.l.b16 %v1167
    %v1320 = vunpack.c.l.b16 %v1168
    %v1321 = vunpack.c.l.b16 %v1169
    %v1322 = vunpack.c.l.b16 %v1170
    %v1323 = vunpack.c.l.b16 %v1171
    %v1324 = vunpack.c.l.b16 %v1172
    %v1325 = vpack.c.b16 %v1310, %v1309
    %v1326 = vpack.c.b16 %v1312, %v1311
    %v1327 = vpack.c.b16 %v1314, %v1313
    %v1328 = vpack.c.b16 %v1316, %v1315
    %v1329 = vpack.c.b16 %v1318, %v1317
    %v1330 = vpack.c.b16 %v1320, %v1319
    %v1331 = vpack.c.b16 %v1322, %v1321
    %v1332 = vpack.c.b16 %v1324, %v1323
    %1341 = vmatprep.subr.bf16.mxu0 0
    %1342 = vmatpush1.bf16.msra.mxu0 %v1325
    %1343 = vmatprep.subr.bf16.mxu0 0
    %1344 = vmatpush1.bf16.msra.mxu0 %v1326
    %1345 = vmatprep.subr.bf16.mxu0 0
    %1346 = vmatpush1.bf16.msra.mxu0 %v1327
    %1347 = vmatprep.subr.bf16.mxu0 0
    %1348 = vmatpush1.bf16.msra.mxu0 %v1328
    %1349 = vmatprep.subr.bf16.mxu0 0
    %1350 = vmatpush1.bf16.msra.mxu0 %v1329
    %1351 = vmatprep.subr.bf16.mxu0 0
    %1352 = vmatpush1.bf16.msra.mxu0 %v1330
    %1353 = vmatprep.subr.bf16.mxu0 0
    %1354 = vmatpush1.bf16.msra.mxu0 %v1331
    %1355 = vmatprep.subr.bf16.mxu0 0
    %1356 = vmatpush1.bf16.msra.mxu0 %v1332
    %1357 = vmatprep.subr.bf16.mxu0 0
    %1358 = vmatpush1.bf16.msra.mxu0 0
    %1359 = vmatprep.subr.bf16.mxu0 0
    %1360 = vmatpush1.bf16.msra.mxu0 0
    %1361 = vmatprep.subr.bf16.mxu0 0
    %1362 = vmatpush1.bf16.msra.mxu0 0
    %1363 = vmatprep.subr.bf16.mxu0 0
    %1364 = vmatpush1.bf16.msra.mxu0 0
    %1365 = vmatprep.subr.bf16.mxu0 0
    %1366 = vmatpush1.bf16.msra.mxu0 0
    %1367 = vmatprep.subr.bf16.mxu0 0
    %1368 = vmatpush1.bf16.msra.mxu0 0
    %1369 = vmatprep.subr.bf16.mxu0 0
    %1370 = vmatpush1.bf16.msra.mxu0 0
    %1371 = vmatprep.subr.bf16.mxu0 0
    %1372 = vmatpush1.bf16.msra.mxu0 0
    %1373 = vmatprep.mubr.bf16.mxu0 0
    %1374 = vmatmul.mubr.bf16.gmra.mrb[0].mxu0 %v1286
    %v1375 = vpop.f32.mrb[0].mxu0
    %v1376 = vadd.f32 %v1291, %v1375
    %v1377 = vpop.f32.mrb[0].mxu0
    %v1378 = vpop.f32.mrb[0].mxu0
    %v1379 = vpop.f32.mrb[0].mxu0
    %1380 = vdwg.mxu0
    %v1381 = vmax.f32 %v1376, 0.0
    %v1382 = vpack.c.bf16 %v1381, %v1381
    %v1384 = vlaneseq
    %v1385 = vshrl.u32 %v1384, 7
    %v1386 = vsub.s32 0, %v1385
    %v1387 = vrot.slane %v1190, %v1386
    %v1405 = vunpack.c.l.b16 %v1174
    %v1406 = vunpack.c.l.b16 %v1175
    %v1407 = vunpack.c.l.b16 %v1176
    %v1408 = vunpack.c.l.b16 %v1177
    %v1409 = vunpack.c.l.b16 %v1178
    %v1410 = vunpack.c.l.b16 %v1179
    %v1411 = vunpack.c.l.b16 %v1180
    %v1412 = vunpack.c.l.b16 %v1181
    %v1413 = vunpack.c.l.b16 %v1182
    %v1414 = vunpack.c.l.b16 %v1183
    %v1415 = vunpack.c.l.b16 %v1184
    %v1416 = vunpack.c.l.b16 %v1185
    %v1417 = vunpack.c.l.b16 %v1186
    %v1418 = vunpack.c.l.b16 %v1187
    %v1419 = vunpack.c.l.b16 %v1188
    %v1420 = vunpack.c.l.b16 %v1189
    %v1421 = vpack.c.b16 %v1406, %v1405
    %v1422 = vpack.c.b16 %v1408, %v1407
    %v1423 = vpack.c.b16 %v1410, %v1409
    %v1424 = vpack.c.b16 %v1412, %v1411
    %v1425 = vpack.c.b16 %v1414, %v1413
    %v1426 = vpack.c.b16 %v1416, %v1415
    %v1427 = vpack.c.b16 %v1418, %v1417
    %v1428 = vpack.c.b16 %v1420, %v1419
    %1437 = vmatprep.subr.bf16.mxu0 0
    %1438 = vmatpush1.bf16.msra.mxu0 %v1421
    %1439 = vmatprep.subr.bf16.mxu0 0
    %1440 = vmatpush1.bf16.msra.mxu0 %v1422
    %1441 = vmatprep.subr.bf16.mxu0 0
    %1442 = vmatpush1.bf16.msra.mxu0 %v1423
    %1443 = vmatprep.subr.bf16.mxu0 0
    %1444 = vmatpush1.bf16.msra.mxu0 %v1424
    %1445 = vmatprep.subr.bf16.mxu0 0
    %1446 = vmatpush1.bf16.msra.mxu0 %v1425
    %1447 = vmatprep.subr.bf16.mxu0 0
    %1448 = vmatpush1.bf16.msra.mxu0 %v1426
    %1449 = vmatprep.subr.bf16.mxu0 0
    %1450 = vmatpush1.bf16.msra.mxu0 %v1427
    %1451 = vmatprep.subr.bf16.mxu0 0
    %1452 = vmatpush1.bf16.msra.mxu0 %v1428
    %1453 = vmatprep.subr.bf16.mxu0 0
    %1454 = vmatpush1.bf16.msra.mxu0 0
    %1455 = vmatprep.subr.bf16.mxu0 0
    %1456 = vmatpush1.bf16.msra.mxu0 0
    %1457 = vmatprep.subr.bf16.mxu0 0
    %1458 = vmatpush1.bf16.msra.mxu0 0
    %1459 = vmatprep.subr.bf16.mxu0 0
    %1460 = vmatpush1.bf16.msra.mxu0 0
    %1461 = vmatprep.subr.bf16.mxu0 0
    %1462 = vmatpush1.bf16.msra.mxu0 0
    %1463 = vmatprep.subr.bf16.mxu0 0
    %1464 = vmatpush1.bf16.msra.mxu0 0
    %1465 = vmatprep.subr.bf16.mxu0 0
    %1466 = vmatpush1.bf16.msra.mxu0 0
    %1467 = vmatprep.subr.bf16.mxu0 0
    %1468 = vmatpush1.bf16.msra.mxu0 0
    %1469 = vmatprep.mubr.bf16.mxu0 0
    %1470 = vmatmul.mubr.bf16.gmra.mrb[0].mxu0 %v1382
    %v1471 = vpop.f32.mrb[0].mxu0
    %v1472 = vadd.f32 %v1387, %v1471
    %v1473 = vpop.f32.mrb[0].mxu0
    %v1474 = vpop.f32.mrb[0].mxu0
    %v1475 = vpop.f32.mrb[0].mxu0
    %1476 = vdwg.mxu0
    %1477 = vst [vmem:[#allocation2] sm:$0x3] %v325
    %1478 = vst [vmem:[#allocation4] sm:$0x3] %v667
    %1479 = vst [vmem:[%s25] sm:$0x3] %v1135
    %1480 = vst [vmem:[%s26] sm:$0x3] %v1472
    // Predicated region
    $region94: #{pipeline_fwd.1} parent=1 // pred_check
      _
    $region95: #{pipeline_fwd.1} parent=1 // pred_check_branch
      %1482 = sbr.rel (0) target = $region97
    $region96: #{pipeline_fwd.1} parent=1 // pred_region
      %s1484 = ssub.s32 32, 32
      %1485 = vsyncadd [#allocation3], %s1484
      %s1487 = sshll.u32 [#allocation2], 4
      %s1488 = int_to_ptr.vmem [resolvable:$true] %s1487
      %1490 = dma.vmem_to_hbm [thread:$0]  %s1488, 32, %s23, [#allocation3]
    $region97: #{pipeline_fwd.1} parent=1 // pred_fallthru
      _
    // Predicated region
    $region98: #{pipeline_fwd.1} parent=1 // pred_check
      _
    $region99: #{pipeline_fwd.1} parent=1 // pred_check_branch
      %1492 = sbr.rel (0) target = $region101
    $region100: #{pipeline_fwd.1} parent=1 // pred_region
      %s1494 = ssub.s32 32, 32
      %1495 = vsyncadd [#allocation5], %s1494
      %s1497 = sshll.u32 [#allocation4], 4
      %s1498 = int_to_ptr.vmem [resolvable:$true] %s1497
      %1500 = dma.vmem_to_hbm [thread:$0]  %s1498, 32, %s24, [#allocation5]
    $region101: #{pipeline_fwd.1} parent=1 // pred_fallthru
      _
    // Predicated region
    $region102: #{pipeline_fwd.1} parent=1 // pred_check
      _
    $region103: #{pipeline_fwd.1} parent=1 // pred_check_branch
      %1502 = sbr.rel (0) target = $region105
    $region104: #{pipeline_fwd.1} parent=1 // pred_region
      _
    $region105: #{pipeline_fwd.1} parent=1 // pred_fallthru
      _
    // Predicated region
    $region106: #{pipeline_fwd.1} parent=1 // pred_check
      _
    $region107: #{pipeline_fwd.1} parent=1 // pred_check_branch
      %1504 = sbr.rel (0) target = $region109
    $region108: #{pipeline_fwd.1} parent=1 // pred_region
      _
    $region109: #{pipeline_fwd.1} parent=1 // pred_fallthru
      _
    // Predicated region
    $region110: #{pipeline_fwd.1} parent=1 // pred_check
      _
    $region111: #{pipeline_fwd.1} parent=1 // pred_check_branch
      %1506 = sbr.rel (0) target = $region113
    $region112: #{pipeline_fwd.1} parent=1 // pred_region
      %1507 = dma.done [#allocation3], 32
    $region113: #{pipeline_fwd.1} parent=1 // pred_fallthru
      _
    // Predicated region
    $region114: #{pipeline_fwd.1} parent=1 // pred_check
      _
    $region115: #{pipeline_fwd.1} parent=1 // pred_check_branch
      %1509 = sbr.rel (0) target = $region117
    $region116: #{pipeline_fwd.1} parent=1 // pred_region
      %1510 = dma.done [#allocation5], 32
    $region117: #{pipeline_fwd.1} parent=1 // pred_fallthru
      _
    // Predicated region
    $region118: #{pipeline_fwd.1} parent=1 // pred_check
      _
    $region119: #{pipeline_fwd.1} parent=1 // pred_check_branch
      %1512 = sbr.rel (0) target = $region121
    $region120: #{pipeline_fwd.1} parent=1 // pred_region
      _
    $region121: #{pipeline_fwd.1} parent=1 // pred_fallthru
      _
    // Predicated region
    $region122: #{pipeline_fwd.1} parent=1 // pred_check
      _
    $region123: #{pipeline_fwd.1} parent=1 // pred_check_branch
      %1514 = sbr.rel (0) target = $region125
    $region124: #{pipeline_fwd.1} parent=1 // pred_region
      _
    $region125: #{pipeline_fwd.1} parent=1 // pred_fallthru
      _
    %1515 = vsyncpa [#allocation3], 1
    %1516 = vsyncpa [#allocation5], 1

</llo_original>
